<compile_context>
chip_gen: v5e
topology: v5e:2x2
jax: 0.10.0
libtpu: 0.0.40
codegen_flags: <defaults>
</compile_context>

<pallas_src>
from functools import partial

import jax
import jax.numpy as jnp
from jax.experimental import pallas as pl
from jax.experimental.pallas import tpu as pltpu


def _round_up(x, m):
    return ((x + m - 1) // m) * m


def _gate_kernel(*refs, topk, score_func, route_scale, has_bias, out_cols):
    if has_bias:
        x_ref, wt_ref, blin_ref, gbias_ref, w_out_ref, i_out_ref = refs
    else:
        x_ref, wt_ref, blin_ref, w_out_ref, i_out_ref = refs
        gbias_ref = None

    # Native-dtype MXU matmul (bf16 x bf16 -> f32 acc when inputs are bf16);
    # only the post-matmul math runs in f32.
    logits = jnp.dot(x_ref[...], wt_ref[...],
                     preferred_element_type=jnp.float32)
    logits = logits + blin_ref[...]

    TB, E = logits.shape
    expert_ids = jax.lax.broadcasted_iota(jnp.int32, (TB, E), 1)

    def topk_iter(sel):
        """One arg-max round: returns (row_max, idx, masked sel)."""
        row_max = jnp.max(sel, axis=-1, keepdims=True)
        is_max = sel == row_max
        # lowest index among ties (matches first-occurrence top-k behaviour)
        idx = jnp.min(jnp.where(is_max, expert_ids, E), axis=-1, keepdims=True)
        sel = jnp.where(expert_ids == idx, -jnp.inf, sel)
        return row_max, idx, sel

    if has_bias:
        # Extra per-expert selection bias: the activation must be materialized
        # because selection scores and gathered scores differ.
        if score_func == "softmax":
            m = jnp.max(logits, axis=-1, keepdims=True)
            e = jnp.exp(logits - m)
            scores = e * pl.reciprocal(jnp.sum(e, axis=-1, keepdims=True))
        else:  # sigmoid
            scores = pl.reciprocal(1.0 + jnp.exp(-logits))
        orig = scores
        sel = scores + gbias_ref[...]
        vals, idxs = [], []
        for _ in range(topk):                 # K small & static -> unrolled
            _, idx, sel = topk_iter(sel)
            onehot = expert_ids == idx
            vals.append(jnp.sum(jnp.where(onehot, orig, 0.0), axis=-1,
                                keepdims=True))
            idxs.append(idx)
        weights = jnp.concatenate(vals, axis=-1)            # (TB, K)
        indices = jnp.concatenate(idxs, axis=-1)            # (TB, K)
        if score_func == "sigmoid":
            weights = weights * pl.reciprocal(
                jnp.sum(weights, axis=-1, keepdims=True))
    else:
        # No selection bias: softmax/sigmoid are strictly monotonic, so select
        # directly on the raw logits and activate only the K winners. This
        # drops the full-width (TB,E) divide / sigmoid and the onehot gather.
        sel = logits
        vals, idxs = [], []
        for _ in range(topk):
            row_max, idx, sel = topk_iter(sel)
            vals.append(row_max)
            idxs.append(idx)
        top_logits = jnp.concatenate(vals, axis=-1)          # (TB, K)
        indices = jnp.concatenate(idxs, axis=-1)             # (TB, K)
        if score_func == "softmax":
            m = top_logits[:, :1]                            # = row max logit
            sum_e = jnp.sum(jnp.exp(logits - m), axis=-1, keepdims=True)
            weights = jnp.exp(top_logits - m) * pl.reciprocal(sum_e)
        else:  # sigmoid on just the K gathered logits, then renormalize
            w = pl.reciprocal(1.0 + jnp.exp(-top_logits))
            weights = w * pl.reciprocal(jnp.sum(w, axis=-1, keepdims=True))

    weights = weights * route_scale

    # Lane-dense stores: pad (TB, K) -> (TB, out_cols=128) and store once.
    pad = out_cols - topk
    if pad:
        weights = jnp.concatenate(
            [weights, jnp.zeros((TB, pad), jnp.float32)], axis=-1)
        indices = jnp.concatenate(
            [indices, jnp.zeros((TB, pad), jnp.int32)], axis=-1)
    w_out_ref[...] = weights.astype(w_out_ref.dtype)
    i_out_ref[...] = indices.astype(jnp.int32)


def _build_specs(TB, D, E, has_bias, out_cols, single_buffer_resident):
    # Constant-index (resident) operands don't need double buffering.
    res_kw = dict(pipeline_mode=pl.Buffered(1)) if single_buffer_resident else {}
    in_specs = [
        pl.BlockSpec((TB, D), lambda i: (i, 0)),             # x token block
        pl.BlockSpec((D, E), lambda i: (0, 0), **res_kw),    # gate weight
        pl.BlockSpec((1, E), lambda i: (0, 0), **res_kw),    # linear bias
    ]
    if has_bias:
        in_specs.append(pl.BlockSpec((1, E), lambda i: (0, 0), **res_kw))
    out_specs = [
        pl.BlockSpec((TB, out_cols), lambda i: (i, 0)),
        pl.BlockSpec((TB, out_cols), lambda i: (i, 0)),
    ]
    return in_specs, out_specs


def gate_forward(x, weight, lin_bias, gate_bias, *, topk, score_func,
                 route_scale, token_block=512):
    """x: (T, D); weight: (E, D); lin_bias: (E,); gate_bias: (E,) or None.

    Returns (weights (T, K) in x.dtype, indices (T, K) int32)."""
    T, D = x.shape
    E, D2 = weight.shape
    assert D == D2 and topk <= E
    has_bias = gate_bias is not None

    # Token-block sizing: large enough to amortize per-grid-step overhead, but
    # keep >= 2 grid steps when possible so the "parallel" axis can shard
    # across TensorCores (v7x) and the pipeline overlaps DMA with compute.
    TB = min(token_block, _round_up(T, 8))
    if TB > 8 and _round_up(T, TB) // TB < 2:
        TB = _round_up((T + 1) // 2, 8)
    T_pad = _round_up(T, TB)
    if T_pad != T:
        x = jnp.pad(x, ((0, T_pad - T), (0, 0)))

    out_cols = max(128, _round_up(topk, 128))     # lane-dense output slab

    wt = weight.T.astype(x.dtype)                 # (D, E), VMEM-resident
    blin = lin_bias.reshape(1, E).astype(jnp.float32)
    operands = [x, wt, blin]
    if has_bias:
        operands.append(gate_bias.reshape(1, E).astype(jnp.float32))

    kernel = partial(_gate_kernel, topk=topk, score_func=score_func,
                     route_scale=float(route_scale), has_bias=has_bias,
                     out_cols=out_cols)

    x_bytes = jnp.dtype(x.dtype).itemsize
    # VMEM budget: x double-buffered, weight/biases single-buffered, outputs
    # double-buffered, plus f32 working set for the (TB, E) score math.
    vmem_need = (2 * TB * D * x_bytes + D * E * x_bytes + 4 * E * 4
                 + 2 * 2 * TB * out_cols * 4 + 6 * TB * E * 4)
    vmem_limit = int(max(32 << 20, min(2 * vmem_need, 64 << 20)))

    cost = pl.CostEstimate(
        flops=2 * T_pad * D * E + (3 * topk + 4) * T_pad * E,
        transcendentals=T_pad * E,
        bytes_accessed=(T_pad * D * x_bytes + D * E * x_bytes
                        + 2 * T_pad * out_cols * 4 + 4 * E * 4),
    )

    out_shape = (jax.ShapeDtypeStruct((T_pad, out_cols), x.dtype),
                 jax.ShapeDtypeStruct((T_pad, out_cols), jnp.int32))

    last_err = None
    # Try single-buffered resident operands first; fall back to default
    # (double-buffered) specs if this JAX build rejects Buffered(1).
    for single_buffer in (True, False):
        try:
            in_specs, out_specs = _build_specs(TB, D, E, has_bias, out_cols,
                                               single_buffer)
            grid_spec = pltpu.PrefetchScalarGridSpec(
                num_scalar_prefetch=0,
                grid=(T_pad // TB,),
                in_specs=in_specs,
                out_specs=out_specs,
            )
            weights, indices = pl.pallas_call(
                kernel,
                grid_spec=grid_spec,
                out_shape=out_shape,
                compiler_params=pltpu.CompilerParams(
                    dimension_semantics=("parallel",),
                    vmem_limit_bytes=vmem_limit),
                cost_estimate=cost,
            )(*operands)
            weights, indices = jax.block_until_ready((weights, indices))
            break
        except Exception as e:  # noqa: BLE001 - retry without Buffered(1)
            last_err = e
    else:
        raise last_err

    return weights[:T, :topk], indices[:T, :topk]


def gate_reference(x, weight, lin_bias, gate_bias, *, topk, score_func,
                   route_scale):
    """Pure-JAX reference mirroring Gate.forward."""
    logits = (x.astype(jnp.float32) @ weight.T.astype(jnp.float32)
              + lin_bias.astype(jnp.float32))
    if score_func == "softmax":
        scores = jax.nn.softmax(logits, axis=-1)
    else:
        scores = jax.nn.sigmoid(logits)
    orig = scores
    sel = scores + (gate_bias.astype(jnp.float32)
                    if gate_bias is not None else 0.0)
    _, idx = jax.lax.top_k(sel, topk)
    w = jnp.take_along_axis(orig, idx, axis=-1)
    if score_func == "sigmoid":
        w = w / jnp.sum(w, axis=-1, keepdims=True)
    w = w * route_scale
    return w.astype(x.dtype), idx.astype(jnp.int32)


if __name__ == "__main__":
    key = jax.random.PRNGKey(0)

    batch, seq = 2, 8
    T = batch * seq
    n_routed_experts = 16
    topk = 4
    route_scale = 1.5

    configs = [
        ("dim=64, with selection bias", 64, True),   # dim == 64 -> bias path
        ("dim=32, no selection bias", 32, False),    # monotonic shortcut path
    ]

    for name, dim, with_bias in configs:
        k1, k2, k3, k4, key = jax.random.split(key, 5)
        x = jax.random.normal(k1, (T, dim), dtype=jnp.float32)
        weight = jax.random.normal(k2, (n_routed_experts, dim),
                                   dtype=jnp.float32) * 0.2
        lin_bias = jax.random.normal(k3, (n_routed_experts,),
                                     dtype=jnp.float32) * 0.1
        gate_bias = (jax.random.normal(k4, (n_routed_experts,),
                                       dtype=jnp.float32) * 0.1
                     if with_bias else None)

        for score_func in ("softmax", "sigmoid"):
            w_k, i_k = gate_forward(x, weight, lin_bias, gate_bias, topk=topk,
                                    score_func=score_func,
                                    route_scale=route_scale)
            w_k = jax.block_until_ready(w_k)
            i_k = jax.block_until_ready(i_k)

            w_r, i_r = gate_reference(x, weight, lin_bias, gate_bias,
                                      topk=topk, score_func=score_func,
                                      route_scale=route_scale)

            assert w_k.shape == (T, topk) and i_k.shape == (T, topk)
            assert w_k.dtype == x.dtype and i_k.dtype == jnp.int32
            assert jnp.array_equal(i_k, i_r), \
                f"indices mismatch ({name}, {score_func})"
            assert jnp.allclose(w_k, w_r, atol=1e-5, rtol=1e-5), \
                f"weights mismatch ({name}, {score_func})"

    print("KERNEL_OK")
</pallas_src>

<mosaic_0001>
module attributes {stable_mosaic.version = 11 : i64} {
  func.func @_gate_kernel(%arg0: i32, %arg1: memref<8x64xf32, #tpu.memory_space<vmem>>, %arg2: memref<64x16xf32, #tpu.memory_space<vmem>>, %arg3: memref<1x16xf32, #tpu.memory_space<vmem>>, %arg4: memref<1x16xf32, #tpu.memory_space<vmem>>, %arg5: memref<8x128xf32, #tpu.memory_space<vmem>>, %arg6: memref<8x128xi32, #tpu.memory_space<vmem>>) attributes {dimension_semantics = [#tpu.dimension_semantics<parallel>], iteration_bounds = array<i64: 2>, scalar_prefetch = 0 : i64, scratch_operands = 0 : i64, tpu.core_type = #tpu.core_type<tc>, window_params = [{transform_indices = @transform_0, window_bounds = array<i64: 8, 64>}, {pipeline_mode = #tpu.pipeline_mode<synchronous>, transform_indices = @transform_1, window_bounds = array<i64: 64, 16>}, {pipeline_mode = #tpu.pipeline_mode<synchronous>, transform_indices = @transform_2, window_bounds = array<i64: 1, 16>}, {pipeline_mode = #tpu.pipeline_mode<synchronous>, transform_indices = @transform_3, window_bounds = array<i64: 1, 16>}, {transform_indices = @transform_4, window_bounds = array<i64: 8, 128>}, {transform_indices = @transform_5, window_bounds = array<i64: 8, 128>}]} {
    %c0 = arith.constant 0 : index
    %c0_0 = arith.constant 0 : index
    %0 = vector.load %arg1[%c0, %c0_0] : memref<8x64xf32, #tpu.memory_space<vmem>>, vector<8x64xf32>
    %c0_1 = arith.constant 0 : index
    %c0_2 = arith.constant 0 : index
    %1 = vector.load %arg2[%c0_1, %c0_2] : memref<64x16xf32, #tpu.memory_space<vmem>>, vector<64x16xf32>
    %cst = arith.constant dense<0.000000e+00> : vector<8x16xf32>
    %2 = tpu.matmul %0, %1, %cst {dimension_numbers = #tpu.dot_dimension_numbers<[1], [0], [0], [1], [0, 0, 1, 1], [], []>} : vector<8x64xf32>, vector<64x16xf32>, vector<8x16xf32> -> vector<8x16xf32>
    %c0_3 = arith.constant 0 : index
    %c0_4 = arith.constant 0 : index
    %3 = vector.load %arg3[%c0_3, %c0_4] : memref<1x16xf32, #tpu.memory_space<vmem>>, vector<1x16xf32>
    %4 = vector.broadcast %3 : vector<1x16xf32> to vector<8x16xf32>
    %5 = arith.addf %2, %4 : vector<8x16xf32>
    %6 = tpu.iota {dimensions = array<i32: 1>} : vector<8x16xi32>
    %cst_5 = arith.constant dense<0xFF800000> : vector<8xf32>
    %7 = vector.multi_reduction <maximumf>, %5, %cst_5 [1] : vector<8x16xf32> to vector<8xf32>
    %8 = vector.shape_cast %7 : vector<8xf32> to vector<8x1xf32>
    %9 = vector.broadcast %8 : vector<8x1xf32> to vector<8x16xf32>
    %10 = arith.subf %5, %9 : vector<8x16xf32>
    %11 = math.exp %10 : vector<8x16xf32>
    %cst_6 = arith.constant dense<0.000000e+00> : vector<8xf32>
    %12 = vector.multi_reduction <add>, %11, %cst_6 [1] : vector<8x16xf32> to vector<8xf32>
    %13 = vector.shape_cast %12 : vector<8xf32> to vector<8x1xf32>
    %14 = tpu.reciprocal %13 : vector<8x1xf32> -> vector<8x1xf32>
    %15 = vector.broadcast %14 : vector<8x1xf32> to vector<8x16xf32>
    %16 = arith.mulf %11, %15 : vector<8x16xf32>
    %c0_7 = arith.constant 0 : index
    %c0_8 = arith.constant 0 : index
    %17 = vector.load %arg4[%c0_7, %c0_8] : memref<1x16xf32, #tpu.memory_space<vmem>>, vector<1x16xf32>
    %18 = vector.broadcast %17 : vector<1x16xf32> to vector<8x16xf32>
    %19 = arith.addf %16, %18 : vector<8x16xf32>
    %cst_9 = arith.constant dense<0xFF800000> : vector<8xf32>
    %20 = vector.multi_reduction <maximumf>, %19, %cst_9 [1] : vector<8x16xf32> to vector<8xf32>
    %21 = vector.shape_cast %20 : vector<8xf32> to vector<8x1xf32>
    %22 = vector.broadcast %21 : vector<8x1xf32> to vector<8x16xf32>
    %23 = arith.cmpf oeq, %19, %22 : vector<8x16xf32>
    %c16_i32 = arith.constant 16 : i32
    %24 = vector.broadcast %c16_i32 : i32 to vector<8x16xi32>
    %25 = arith.select %23, %6, %24 : vector<8x16xi1>, vector<8x16xi32>
    %cst_10 = arith.constant dense<2147483647> : vector<8xi32>
    %26 = vector.multi_reduction <minsi>, %25, %cst_10 [1] : vector<8x16xi32> to vector<8xi32>
    %27 = vector.shape_cast %26 : vector<8xi32> to vector<8x1xi32>
    %28 = vector.broadcast %27 : vector<8x1xi32> to vector<8x16xi32>
    %29 = arith.cmpi eq, %6, %28 : vector<8x16xi32>
    %cst_11 = arith.constant 0xFF800000 : f32
    %30 = vector.broadcast %cst_11 : f32 to vector<8x16xf32>
    %31 = arith.select %29, %30, %19 : vector<8x16xi1>, vector<8x16xf32>
    %32 = vector.broadcast %27 : vector<8x1xi32> to vector<8x16xi32>
    %33 = arith.cmpi eq, %6, %32 : vector<8x16xi32>
    %cst_12 = arith.constant 0.000000e+00 : f32
    %34 = vector.broadcast %cst_12 : f32 to vector<8x16xf32>
    %35 = arith.select %33, %16, %34 : vector<8x16xi1>, vector<8x16xf32>
    %cst_13 = arith.constant dense<0.000000e+00> : vector<8xf32>
    %36 = vector.multi_reduction <add>, %35, %cst_13 [1] : vector<8x16xf32> to vector<8xf32>
    %37 = vector.shape_cast %36 : vector<8xf32> to vector<8x1xf32>
    %cst_14 = arith.constant dense<0xFF800000> : vector<8xf32>
    %38 = vector.multi_reduction <maximumf>, %31, %cst_14 [1] : vector<8x16xf32> to vector<8xf32>
    %39 = vector.shape_cast %38 : vector<8xf32> to vector<8x1xf32>
    %40 = vector.broadcast %39 : vector<8x1xf32> to vector<8x16xf32>
    %41 = arith.cmpf oeq, %31, %40 : vector<8x16xf32>
    %c16_i32_15 = arith.constant 16 : i32
    %42 = vector.broadcast %c16_i32_15 : i32 to vector<8x16xi32>
    %43 = arith.select %41, %6, %42 : vector<8x16xi1>, vector<8x16xi32>
    %cst_16 = arith.constant dense<2147483647> : vector<8xi32>
    %44 = vector.multi_reduction <minsi>, %43, %cst_16 [1] : vector<8x16xi32> to vector<8xi32>
    %45 = vector.shape_cast %44 : vector<8xi32> to vector<8x1xi32>
    %46 = vector.broadcast %45 : vector<8x1xi32> to vector<8x16xi32>
    %47 = arith.cmpi eq, %6, %46 : vector<8x16xi32>
    %cst_17 = arith.constant 0xFF800000 : f32
    %48 = vector.broadcast %cst_17 : f32 to vector<8x16xf32>
    %49 = arith.select %47, %48, %31 : vector<8x16xi1>, vector<8x16xf32>
    %50 = vector.broadcast %45 : vector<8x1xi32> to vector<8x16xi32>
    %51 = arith.cmpi eq, %6, %50 : vector<8x16xi32>
    %cst_18 = arith.constant 0.000000e+00 : f32
    %52 = vector.broadcast %cst_18 : f32 to vector<8x16xf32>
    %53 = arith.select %51, %16, %52 : vector<8x16xi1>, vector<8x16xf32>
    %cst_19 = arith.constant dense<0.000000e+00> : vector<8xf32>
    %54 = vector.multi_reduction <add>, %53, %cst_19 [1] : vector<8x16xf32> to vector<8xf32>
    %55 = vector.shape_cast %54 : vector<8xf32> to vector<8x1xf32>
    %cst_20 = arith.constant dense<0xFF800000> : vector<8xf32>
    %56 = vector.multi_reduction <maximumf>, %49, %cst_20 [1] : vector<8x16xf32> to vector<8xf32>
    %57 = vector.shape_cast %56 : vector<8xf32> to vector<8x1xf32>
    %58 = vector.broadcast %57 : vector<8x1xf32> to vector<8x16xf32>
    %59 = arith.cmpf oeq, %49, %58 : vector<8x16xf32>
    %c16_i32_21 = arith.constant 16 : i32
    %60 = vector.broadcast %c16_i32_21 : i32 to vector<8x16xi32>
    %61 = arith.select %59, %6, %60 : vector<8x16xi1>, vector<8x16xi32>
    %cst_22 = arith.constant dense<2147483647> : vector<8xi32>
    %62 = vector.multi_reduction <minsi>, %61, %cst_22 [1] : vector<8x16xi32> to vector<8xi32>
    %63 = vector.shape_cast %62 : vector<8xi32> to vector<8x1xi32>
    %64 = vector.broadcast %63 : vector<8x1xi32> to vector<8x16xi32>
    %65 = arith.cmpi eq, %6, %64 : vector<8x16xi32>
    %cst_23 = arith.constant 0xFF800000 : f32
    %66 = vector.broadcast %cst_23 : f32 to vector<8x16xf32>
    %67 = arith.select %65, %66, %49 : vector<8x16xi1>, vector<8x16xf32>
    %68 = vector.broadcast %63 : vector<8x1xi32> to vector<8x16xi32>
    %69 = arith.cmpi eq, %6, %68 : vector<8x16xi32>
    %cst_24 = arith.constant 0.000000e+00 : f32
    %70 = vector.broadcast %cst_24 : f32 to vector<8x16xf32>
    %71 = arith.select %69, %16, %70 : vector<8x16xi1>, vector<8x16xf32>
    %cst_25 = arith.constant dense<0.000000e+00> : vector<8xf32>
    %72 = vector.multi_reduction <add>, %71, %cst_25 [1] : vector<8x16xf32> to vector<8xf32>
    %73 = vector.shape_cast %72 : vector<8xf32> to vector<8x1xf32>
    %cst_26 = arith.constant dense<0xFF800000> : vector<8xf32>
    %74 = vector.multi_reduction <maximumf>, %67, %cst_26 [1] : vector<8x16xf32> to vector<8xf32>
    %75 = vector.shape_cast %74 : vector<8xf32> to vector<8x1xf32>
    %76 = vector.broadcast %75 : vector<8x1xf32> to vector<8x16xf32>
    %77 = arith.cmpf oeq, %67, %76 : vector<8x16xf32>
    %c16_i32_27 = arith.constant 16 : i32
    %78 = vector.broadcast %c16_i32_27 : i32 to vector<8x16xi32>
    %79 = arith.select %77, %6, %78 : vector<8x16xi1>, vector<8x16xi32>
    %cst_28 = arith.constant dense<2147483647> : vector<8xi32>
    %80 = vector.multi_reduction <minsi>, %79, %cst_28 [1] : vector<8x16xi32> to vector<8xi32>
    %81 = vector.shape_cast %80 : vector<8xi32> to vector<8x1xi32>
    %82 = vector.broadcast %81 : vector<8x1xi32> to vector<8x16xi32>
    %83 = arith.cmpi eq, %6, %82 : vector<8x16xi32>
    %cst_29 = arith.constant 0.000000e+00 : f32
    %84 = vector.broadcast %cst_29 : f32 to vector<8x16xf32>
    %85 = arith.select %83, %16, %84 : vector<8x16xi1>, vector<8x16xf32>
    %cst_30 = arith.constant dense<0.000000e+00> : vector<8xf32>
    %86 = vector.multi_reduction <add>, %85, %cst_30 [1] : vector<8x16xf32> to vector<8xf32>
    %87 = vector.shape_cast %86 : vector<8xf32> to vector<8x1xf32>
    %88 = tpu.concatenate %37, %55, %73, %87 in 1 : vector<8x1xf32>, vector<8x1xf32>, vector<8x1xf32>, vector<8x1xf32> -> vector<8x4xf32>
    %89 = tpu.concatenate %27, %45, %63, %81 in 1 : vector<8x1xi32>, vector<8x1xi32>, vector<8x1xi32>, vector<8x1xi32> -> vector<8x4xi32>
    %cst_31 = arith.constant 1.500000e+00 : f32
    %90 = vector.broadcast %cst_31 : f32 to vector<8x4xf32>
    %91 = arith.mulf %88, %90 : vector<8x4xf32>
    %cst_32 = arith.constant 0.000000e+00 : f32
    %92 = vector.broadcast %cst_32 : f32 to vector<8x124xf32>
    %93 = tpu.concatenate %91, %92 in 1 : vector<8x4xf32>, vector<8x124xf32> -> vector<8x128xf32>
    %c0_i32 = arith.constant 0 : i32
    %94 = vector.broadcast %c0_i32 : i32 to vector<8x124xi32>
    %95 = tpu.concatenate %89, %94 in 1 : vector<8x4xi32>, vector<8x124xi32> -> vector<8x128xi32>
    %c0_33 = arith.constant 0 : index
    %c0_34 = arith.constant 0 : index
    %96 = vector.load %arg5[%c0_33, %c0_34] : memref<8x128xf32, #tpu.memory_space<vmem>>, vector<8x128xf32>
    tpu.vector_store %arg5[%c0_33, %c0_34], %93 {strides = array<i32>} : memref<8x128xf32, #tpu.memory_space<vmem>>, vector<8x128xf32>,
    %c0_35 = arith.constant 0 : index
    %c0_36 = arith.constant 0 : index
    %97 = vector.load %arg6[%c0_35, %c0_36] : memref<8x128xi32, #tpu.memory_space<vmem>>, vector<8x128xi32>
    tpu.vector_store %arg6[%c0_35, %c0_36], %95 {strides = array<i32>} : memref<8x128xi32, #tpu.memory_space<vmem>>, vector<8x128xi32>,
    return
  }
  func.func @transform_0(%arg0: i32) -> (i32, i32) {
    %c0_i32 = arith.constant 0 : i32
    %c0_i32_0 = arith.constant 0 : i32
    return %arg0, %c0_i32 : i32, i32
  }
  func.func @transform_1(%arg0: i32) -> (i32, i32) {
    %c0_i32 = arith.constant 0 : i32
    %c0_i32_0 = arith.constant 0 : i32
    %c0_i32_1 = arith.constant 0 : i32
    return %c0_i32, %c0_i32_0 : i32, i32
  }
  func.func @transform_2(%arg0: i32) -> (i32, i32) {
    %c0_i32 = arith.constant 0 : i32
    %c0_i32_0 = arith.constant 0 : i32
    %c0_i32_1 = arith.constant 0 : i32
    return %c0_i32, %c0_i32_0 : i32, i32
  }
  func.func @transform_3(%arg0: i32) -> (i32, i32) {
    %c0_i32 = arith.constant 0 : i32
    %c0_i32_0 = arith.constant 0 : i32
    %c0_i32_1 = arith.constant 0 : i32
    return %c0_i32, %c0_i32_0 : i32, i32
  }
  func.func @transform_4(%arg0: i32) -> (i32, i32) {
    %c0_i32 = arith.constant 0 : i32
    %c0_i32_0 = arith.constant 0 : i32
    return %arg0, %c0_i32 : i32, i32
  }
  func.func @transform_5(%arg0: i32) -> (i32, i32) {
    %c0_i32 = arith.constant 0 : i32
    %c0_i32_0 = arith.constant 0 : i32
    return %arg0, %c0_i32 : i32, i32
  }
}

module attributes {stable_mosaic.version = 11 : i64} {
  func.func @_gate_kernel(%arg0: i32, %arg1: memref<8x64xf32, #tpu.memory_space<vmem>>, %arg2: memref<64x16xf32, #tpu.memory_space<vmem>>, %arg3: memref<1x16xf32, #tpu.memory_space<vmem>>, %arg4: memref<1x16xf32, #tpu.memory_space<vmem>>, %arg5: memref<8x128xf32, #tpu.memory_space<vmem>>, %arg6: memref<8x128xi32, #tpu.memory_space<vmem>>) attributes {dimension_semantics = [#tpu.dimension_semantics<parallel>], iteration_bounds = array<i64: 2>, scalar_prefetch = 0 : i64, scratch_operands = 0 : i64, tpu.core_type = #tpu.core_type<tc>, window_params = [{transform_indices = @transform_0, window_bounds = array<i64: 8, 64>}, {pipeline_mode = #tpu.pipeline_mode<synchronous>, transform_indices = @transform_1, window_bounds = array<i64: 64, 16>}, {pipeline_mode = #tpu.pipeline_mode<synchronous>, transform_indices = @transform_2, window_bounds = array<i64: 1, 16>}, {pipeline_mode = #tpu.pipeline_mode<synchronous>, transform_indices = @transform_3, window_bounds = array<i64: 1, 16>}, {transform_indices = @transform_4, window_bounds = array<i64: 8, 128>}, {transform_indices = @transform_5, window_bounds = array<i64: 8, 128>}]} {
    %c0 = arith.constant 0 : index
    %c0_0 = arith.constant 0 : index
    %0 = vector.load %arg1[%c0, %c0_0] : memref<8x64xf32, #tpu.memory_space<vmem>>, vector<8x64xf32>
    %c0_1 = arith.constant 0 : index
    %c0_2 = arith.constant 0 : index
    %1 = vector.load %arg2[%c0_1, %c0_2] : memref<64x16xf32, #tpu.memory_space<vmem>>, vector<64x16xf32>
    %cst = arith.constant dense<0.000000e+00> : vector<8x16xf32>
    %2 = tpu.matmul %0, %1, %cst {dimension_numbers = #tpu.dot_dimension_numbers<[1], [0], [0], [1], [0, 0, 1, 1], [], []>} : vector<8x64xf32>, vector<64x16xf32>, vector<8x16xf32> -> vector<8x16xf32>
    %c0_3 = arith.constant 0 : index
    %c0_4 = arith.constant 0 : index
    %3 = vector.load %arg3[%c0_3, %c0_4] : memref<1x16xf32, #tpu.memory_space<vmem>>, vector<1x16xf32>
    %4 = vector.broadcast %3 : vector<1x16xf32> to vector<8x16xf32>
    %5 = arith.addf %2, %4 : vector<8x16xf32>
    %6 = tpu.iota {dimensions = array<i32: 1>} : vector<8x16xi32>
    %cst_5 = arith.constant dense<0xFF800000> : vector<8xf32>
    %7 = vector.multi_reduction <maximumf>, %5, %cst_5 [1] : vector<8x16xf32> to vector<8xf32>
    %8 = vector.shape_cast %7 : vector<8xf32> to vector<8x1xf32>
    %9 = vector.broadcast %8 : vector<8x1xf32> to vector<8x16xf32>
    %10 = arith.subf %5, %9 : vector<8x16xf32>
    %11 = math.exp %10 : vector<8x16xf32>
    %cst_6 = arith.constant dense<0.000000e+00> : vector<8xf32>
    %12 = vector.multi_reduction <add>, %11, %cst_6 [1] : vector<8x16xf32> to vector<8xf32>
    %13 = vector.shape_cast %12 : vector<8xf32> to vector<8x1xf32>
    %14 = tpu.reciprocal %13 : vector<8x1xf32> -> vector<8x1xf32>
    %15 = vector.broadcast %14 : vector<8x1xf32> to vector<8x16xf32>
    %16 = arith.mulf %11, %15 : vector<8x16xf32>
    %c0_7 = arith.constant 0 : index
    %c0_8 = arith.constant 0 : index
    %17 = vector.load %arg4[%c0_7, %c0_8] : memref<1x16xf32, #tpu.memory_space<vmem>>, vector<1x16xf32>
    %18 = vector.broadcast %17 : vector<1x16xf32> to vector<8x16xf32>
    %19 = arith.addf %16, %18 : vector<8x16xf32>
    %cst_9 = arith.constant dense<0xFF800000> : vector<8xf32>
    %20 = vector.multi_reduction <maximumf>, %19, %cst_9 [1] : vector<8x16xf32> to vector<8xf32>
    %21 = vector.shape_cast %20 : vector<8xf32> to vector<8x1xf32>
    %22 = vector.broadcast %21 : vector<8x1xf32> to vector<8x16xf32>
    %23 = arith.cmpf oeq, %19, %22 : vector<8x16xf32>
    %c16_i32 = arith.constant 16 : i32
    %24 = vector.broadcast %c16_i32 : i32 to vector<8x16xi32>
    %25 = arith.select %23, %6, %24 : vector<8x16xi1>, vector<8x16xi32>
    %cst_10 = arith.constant dense<2147483647> : vector<8xi32>
    %26 = vector.multi_reduction <minsi>, %25, %cst_10 [1] : vector<8x16xi32> to vector<8xi32>
    %27 = vector.shape_cast %26 : vector<8xi32> to vector<8x1xi32>
    %28 = vector.broadcast %27 : vector<8x1xi32> to vector<8x16xi32>
    %29 = arith.cmpi eq, %6, %28 : vector<8x16xi32>
    %cst_11 = arith.constant 0xFF800000 : f32
    %30 = vector.broadcast %cst_11 : f32 to vector<8x16xf32>
    %31 = arith.select %29, %30, %19 : vector<8x16xi1>, vector<8x16xf32>
    %32 = vector.broadcast %27 : vector<8x1xi32> to vector<8x16xi32>
    %33 = arith.cmpi eq, %6, %32 : vector<8x16xi32>
    %cst_12 = arith.constant 0.000000e+00 : f32
    %34 = vector.broadcast %cst_12 : f32 to vector<8x16xf32>
    %35 = arith.select %33, %16, %34 : vector<8x16xi1>, vector<8x16xf32>
    %cst_13 = arith.constant dense<0.000000e+00> : vector<8xf32>
    %36 = vector.multi_reduction <add>, %35, %cst_13 [1] : vector<8x16xf32> to vector<8xf32>
    %37 = vector.shape_cast %36 : vector<8xf32> to vector<8x1xf32>
    %cst_14 = arith.constant dense<0xFF800000> : vector<8xf32>
    %38 = vector.multi_reduction <maximumf>, %31, %cst_14 [1] : vector<8x16xf32> to vector<8xf32>
    %39 = vector.shape_cast %38 : vector<8xf32> to vector<8x1xf32>
    %40 = vector.broadcast %39 : vector<8x1xf32> to vector<8x16xf32>
    %41 = arith.cmpf oeq, %31, %40 : vector<8x16xf32>
    %c16_i32_15 = arith.constant 16 : i32
    %42 = vector.broadcast %c16_i32_15 : i32 to vector<8x16xi32>
    %43 = arith.select %41, %6, %42 : vector<8x16xi1>, vector<8x16xi32>
    %cst_16 = arith.constant dense<2147483647> : vector<8xi32>
    %44 = vector.multi_reduction <minsi>, %43, %cst_16 [1] : vector<8x16xi32> to vector<8xi32>
    %45 = vector.shape_cast %44 : vector<8xi32> to vector<8x1xi32>
    %46 = vector.broadcast %45 : vector<8x1xi32> to vector<8x16xi32>
    %47 = arith.cmpi eq, %6, %46 : vector<8x16xi32>
    %cst_17 = arith.constant 0xFF800000 : f32
    %48 = vector.broadcast %cst_17 : f32 to vector<8x16xf32>
    %49 = arith.select %47, %48, %31 : vector<8x16xi1>, vector<8x16xf32>
    %50 = vector.broadcast %45 : vector<8x1xi32> to vector<8x16xi32>
    %51 = arith.cmpi eq, %6, %50 : vector<8x16xi32>
    %cst_18 = arith.constant 0.000000e+00 : f32
    %52 = vector.broadcast %cst_18 : f32 to vector<8x16xf32>
    %53 = arith.select %51, %16, %52 : vector<8x16xi1>, vector<8x16xf32>
    %cst_19 = arith.constant dense<0.000000e+00> : vector<8xf32>
    %54 = vector.multi_reduction <add>, %53, %cst_19 [1] : vector<8x16xf32> to vector<8xf32>
    %55 = vector.shape_cast %54 : vector<8xf32> to vector<8x1xf32>
    %cst_20 = arith.constant dense<0xFF800000> : vector<8xf32>
    %56 = vector.multi_reduction <maximumf>, %49, %cst_20 [1] : vector<8x16xf32> to vector<8xf32>
    %57 = vector.shape_cast %56 : vector<8xf32> to vector<8x1xf32>
    %58 = vector.broadcast %57 : vector<8x1xf32> to vector<8x16xf32>
    %59 = arith.cmpf oeq, %49, %58 : vector<8x16xf32>
    %c16_i32_21 = arith.constant 16 : i32
    %60 = vector.broadcast %c16_i32_21 : i32 to vector<8x16xi32>
    %61 = arith.select %59, %6, %60 : vector<8x16xi1>, vector<8x16xi32>
    %cst_22 = arith.constant dense<2147483647> : vector<8xi32>
    %62 = vector.multi_reduction <minsi>, %61, %cst_22 [1] : vector<8x16xi32> to vector<8xi32>
    %63 = vector.shape_cast %62 : vector<8xi32> to vector<8x1xi32>
    %64 = vector.broadcast %63 : vector<8x1xi32> to vector<8x16xi32>
    %65 = arith.cmpi eq, %6, %64 : vector<8x16xi32>
    %cst_23 = arith.constant 0xFF800000 : f32
    %66 = vector.broadcast %cst_23 : f32 to vector<8x16xf32>
    %67 = arith.select %65, %66, %49 : vector<8x16xi1>, vector<8x16xf32>
    %68 = vector.broadcast %63 : vector<8x1xi32> to vector<8x16xi32>
    %69 = arith.cmpi eq, %6, %68 : vector<8x16xi32>
    %cst_24 = arith.constant 0.000000e+00 : f32
    %70 = vector.broadcast %cst_24 : f32 to vector<8x16xf32>
    %71 = arith.select %69, %16, %70 : vector<8x16xi1>, vector<8x16xf32>
    %cst_25 = arith.constant dense<0.000000e+00> : vector<8xf32>
    %72 = vector.multi_reduction <add>, %71, %cst_25 [1] : vector<8x16xf32> to vector<8xf32>
    %73 = vector.shape_cast %72 : vector<8xf32> to vector<8x1xf32>
    %cst_26 = arith.constant dense<0xFF800000> : vector<8xf32>
    %74 = vector.multi_reduction <maximumf>, %67, %cst_26 [1] : vector<8x16xf32> to vector<8xf32>
    %75 = vector.shape_cast %74 : vector<8xf32> to vector<8x1xf32>
    %76 = vector.broadcast %75 : vector<8x1xf32> to vector<8x16xf32>
    %77 = arith.cmpf oeq, %67, %76 : vector<8x16xf32>
    %c16_i32_27 = arith.constant 16 : i32
    %78 = vector.broadcast %c16_i32_27 : i32 to vector<8x16xi32>
    %79 = arith.select %77, %6, %78 : vector<8x16xi1>, vector<8x16xi32>
    %cst_28 = arith.constant dense<2147483647> : vector<8xi32>
    %80 = vector.multi_reduction <minsi>, %79, %cst_28 [1] : vector<8x16xi32> to vector<8xi32>
    %81 = vector.shape_cast %80 : vector<8xi32> to vector<8x1xi32>
    %82 = vector.broadcast %81 : vector<8x1xi32> to vector<8x16xi32>
    %83 = arith.cmpi eq, %6, %82 : vector<8x16xi32>
    %cst_29 = arith.constant 0.000000e+00 : f32
    %84 = vector.broadcast %cst_29 : f32 to vector<8x16xf32>
    %85 = arith.select %83, %16, %84 : vector<8x16xi1>, vector<8x16xf32>
    %cst_30 = arith.constant dense<0.000000e+00> : vector<8xf32>
    %86 = vector.multi_reduction <add>, %85, %cst_30 [1] : vector<8x16xf32> to vector<8xf32>
    %87 = vector.shape_cast %86 : vector<8xf32> to vector<8x1xf32>
    %88 = tpu.concatenate %37, %55, %73, %87 in 1 : vector<8x1xf32>, vector<8x1xf32>, vector<8x1xf32>, vector<8x1xf32> -> vector<8x4xf32>
    %89 = tpu.concatenate %27, %45, %63, %81 in 1 : vector<8x1xi32>, vector<8x1xi32>, vector<8x1xi32>, vector<8x1xi32> -> vector<8x4xi32>
    %cst_31 = arith.constant 1.500000e+00 : f32
    %90 = vector.broadcast %cst_31 : f32 to vector<8x4xf32>
    %91 = arith.mulf %88, %90 : vector<8x4xf32>
    %cst_32 = arith.constant 0.000000e+00 : f32
    %92 = vector.broadcast %cst_32 : f32 to vector<8x124xf32>
    %93 = tpu.concatenate %91, %92 in 1 : vector<8x4xf32>, vector<8x124xf32> -> vector<8x128xf32>
    %c0_i32 = arith.constant 0 : i32
    %94 = vector.broadcast %c0_i32 : i32 to vector<8x124xi32>
    %95 = tpu.concatenate %89, %94 in 1 : vector<8x4xi32>, vector<8x124xi32> -> vector<8x128xi32>
    %c0_33 = arith.constant 0 : index
    %c0_34 = arith.constant 0 : index
    %96 = vector.load %arg5[%c0_33, %c0_34] : memref<8x128xf32, #tpu.memory_space<vmem>>, vector<8x128xf32>
    tpu.vector_store %arg5[%c0_33, %c0_34], %93 {strides = array<i32>} : memref<8x128xf32, #tpu.memory_space<vmem>>, vector<8x128xf32>,
    %c0_35 = arith.constant 0 : index
    %c0_36 = arith.constant 0 : index
    %97 = vector.load %arg6[%c0_35, %c0_36] : memref<8x128xi32, #tpu.memory_space<vmem>>, vector<8x128xi32>
    tpu.vector_store %arg6[%c0_35, %c0_36], %95 {strides = array<i32>} : memref<8x128xi32, #tpu.memory_space<vmem>>, vector<8x128xi32>,
    return
  }
  func.func @transform_0(%arg0: i32) -> (i32, i32) {
    %c0_i32 = arith.constant 0 : i32
    %c0_i32_0 = arith.constant 0 : i32
    return %arg0, %c0_i32 : i32, i32
  }
  func.func @transform_1(%arg0: i32) -> (i32, i32) {
    %c0_i32 = arith.constant 0 : i32
    %c0_i32_0 = arith.constant 0 : i32
    %c0_i32_1 = arith.constant 0 : i32
    return %c0_i32, %c0_i32_0 : i32, i32
  }
  func.func @transform_2(%arg0: i32) -> (i32, i32) {
    %c0_i32 = arith.constant 0 : i32
    %c0_i32_0 = arith.constant 0 : i32
    %c0_i32_1 = arith.constant 0 : i32
    return %c0_i32, %c0_i32_0 : i32, i32
  }
  func.func @transform_3(%arg0: i32) -> (i32, i32) {
    %c0_i32 = arith.constant 0 : i32
    %c0_i32_0 = arith.constant 0 : i32
    %c0_i32_1 = arith.constant 0 : i32
    return %c0_i32, %c0_i32_0 : i32, i32
  }
  func.func @transform_4(%arg0: i32) -> (i32, i32) {
    %c0_i32 = arith.constant 0 : i32
    %c0_i32_0 = arith.constant 0 : i32
    return %arg0, %c0_i32 : i32, i32
  }
  func.func @transform_5(%arg0: i32) -> (i32, i32) {
    %c0_i32 = arith.constant 0 : i32
    %c0_i32_0 = arith.constant 0 : i32
    return %arg0, %c0_i32 : i32, i32
  }
}

</mosaic_0001>

<llo_original>
// kernel: tpu_custom_call.1
$region0: #{tpu_custom_call.1}
  #allocation0 [shape = 'u32[]', space=smem, size = 0x4, offset = 0x4, fixed_abs, tag = 'smem constant byte address 0x4 - core index']
  #allocation1 [shape = 'u32[72,128]{1,0:T(1,128)}', space=vmem, size = 0x9000, scoped, tag = 'internal scratch']
  %s0 = inlined_call_operand.vmem [shape: f32[16,64], index: 0, kind: input, shape index: {}]
  %s1 = inlined_call_operand.vmem [shape: f32[64,16], index: 1, kind: input, shape index: {}]
  %s2 = inlined_call_operand.vmem [shape: f32[1,16], index: 2, kind: input, shape index: {}]
  %s3 = inlined_call_operand.vmem [shape: f32[1,16], index: 3, kind: input, shape index: {}]
  %s4 = inlined_call_operand.hbm [shape: f32[16,128], index: 4, kind: output, shape index: {0}]
  %s5 = inlined_call_operand.hbm [shape: s32[16,128], index: 5, kind: output, shape index: {1}]
  %6 = xla_tuple %s4, %s5
  %s7 = sld [smem:[#allocation0]]
  $region57: #{tpu_custom_call.1} parent=0
    _
  %s9 = ssub.s32 1, %s7
  %s10 = scalar_select 0, %s9, %s7
  $region1: #{tpu_custom_call.1} parent=0
    #allocation2 [shape = 'u8[8192]{0}', space=vmem, size = 0x2000, scoped, tag = 'output window, operand 0']
    #allocation3 [shape = 's32[2]{0}', space=sflag, size = 0x8, scoped, tag = 'scoped memory for tpu_custom_call.1']
    #allocation4 [shape = 'u8[8192]{0}', space=vmem, size = 0x2000, scoped, tag = 'output window, operand 1']
    #allocation5 [shape = 's32[2]{0}', space=sflag, size = 0x8, scoped, tag = 'scoped memory for tpu_custom_call.1']
    %11 = vsyncpa [#allocation3], 0
    %s12 = scalar_lea.sflag [#allocation3], 1
    %13 = vsyncpa %s12, 0
    %14 = vsyncpa [#allocation5], 0
    %s15 = scalar_lea.sflag [#allocation5], 1
    %16 = vsyncpa %s15, 0
    loop: start=0, step=1, limit=4
    $region2: #{tpu_custom_call.1} parent=1 // loop_pre_header
      _
    $region3: #{tpu_custom_call.1} parent=1 // loop_header
      %s18 = sphi 0, %s22
      %p19 = scmp.ge.s32.totalorder %s18, 4
      %s28 = sphi 0, %s30
      %s31 = sphi 0, %s28
      %s32 = sphi 0, %s31
      %s48 = sphi 0, %s32
      %s52 = sphi 0, %s52
      %s54 = sphi 0, %s52
      %s55 = sphi 0, %s54
      %s69 = sphi 0, %s55
      %s73 = sphi 0, %s73
      %s75 = sphi 0, %s73
      %s76 = sphi 0, %s75
      %s90 = sphi 0, %s76
      %s94 = sphi 0, %s94
      %s96 = sphi 0, %s94
      %s97 = sphi 0, %s96
      %s111 = sphi 0, %s97
      %s117 = sphi 0, %s119
      %s120 = sphi 0, %s117
      %s121 = sphi 0, %s120
      %s137 = sphi 0, %s121
      %s143 = sphi 0, %s145
      %s146 = sphi 0, %s143
      %s147 = sphi 0, %s146
      %s163 = sphi 0, %s147
    $region4: #{tpu_custom_call.1} parent=1 // loop_header_branch
      %21 = sbr.rel (%p19) target = $region8
    $region5: #{tpu_custom_call.1} parent=1 // loop_body
      %s23 = ssub.s32 %s18, 1
      %s24 = ssub.s32 %s18, 2
      %s25 = sadd.s32 %s18, 1
      %s26 = ssub.s32 %s18, %s25
      %p27 = scmp.eq.s32.totalorder %s26, 0
      %s29 = sadd.s32 %s28, 1
      %s30 = scalar_select %p27, %s28, %s29
      %p33 = pneg %p27
      %p34 = scmp.eq.s32.totalorder %s18, 1
      %p35 = por %p33, %p34
      %p36 = scmp.ne.s32.totalorder %s28, %s31
      %p37 = scmp.eq.s32.totalorder %s18, 0
      %p38 = por %p36, %p37
      %p39 = scmp.ne.s32.totalorder %s28, %s31
      %p40 = scmp.eq.s32.totalorder %s23, 1
      %p41 = por %p39, %p40
      %p42 = scmp.ne.s32.totalorder %s31, %s32
      %p43 = scmp.eq.s32.totalorder %s23, 0
      %p44 = por %p42, %p43
      %p45 = scmp.ne.s32.totalorder %s31, %s32
      %p46 = scmp.eq.s32.totalorder %s24, 1
      %p47 = por %p45, %p46
      %p49 = scmp.ne.s32.totalorder %s32, %s48
      %p50 = scmp.eq.s32.totalorder %s24, 0
      %p51 = por %p49, %p50
      %s53 = sadd.s32 %s52, 1
      %p56 = scmp.eq.s32.totalorder %s18, 1
      %p57 = scmp.ne.s32.totalorder %s52, %s54
      %p58 = scmp.eq.s32.totalorder %s18, 0
      %p59 = por %p57, %p58
      %p60 = scmp.ne.s32.totalorder %s52, %s54
      %p61 = scmp.eq.s32.totalorder %s23, 1
      %p62 = por %p60, %p61
      %p63 = scmp.ne.s32.totalorder %s54, %s55
      %p64 = scmp.eq.s32.totalorder %s23, 0
      %p65 = por %p63, %p64
      %p66 = scmp.ne.s32.totalorder %s54, %s55
      %p67 = scmp.eq.s32.totalorder %s24, 1
      %p68 = por %p66, %p67
      %p70 = scmp.ne.s32.totalorder %s55, %s69
      %p71 = scmp.eq.s32.totalorder %s24, 0
      %p72 = por %p70, %p71
      %s74 = sadd.s32 %s73, 1
      %p77 = scmp.eq.s32.totalorder %s18, 1
      %p78 = scmp.ne.s32.totalorder %s73, %s75
      %p79 = scmp.eq.s32.totalorder %s18, 0
      %p80 = por %p78, %p79
      %p81 = scmp.ne.s32.totalorder %s73, %s75
      %p82 = scmp.eq.s32.totalorder %s23, 1
      %p83 = por %p81, %p82
      %p84 = scmp.ne.s32.totalorder %s75, %s76
      %p85 = scmp.eq.s32.totalorder %s23, 0
      %p86 = por %p84, %p85
      %p87 = scmp.ne.s32.totalorder %s75, %s76
      %p88 = scmp.eq.s32.totalorder %s24, 1
      %p89 = por %p87, %p88
      %p91 = scmp.ne.s32.totalorder %s76, %s90
      %p92 = scmp.eq.s32.totalorder %s24, 0
      %p93 = por %p91, %p92
      %s95 = sadd.s32 %s94, 1
      %p98 = scmp.eq.s32.totalorder %s18, 1
      %p99 = scmp.ne.s32.totalorder %s94, %s96
      %p100 = scmp.eq.s32.totalorder %s18, 0
      %p101 = por %p99, %p100
      %p102 = scmp.ne.s32.totalorder %s94, %s96
      %p103 = scmp.eq.s32.totalorder %s23, 1
      %p104 = por %p102, %p103
      %p105 = scmp.ne.s32.totalorder %s96, %s97
      %p106 = scmp.eq.s32.totalorder %s23, 0
      %p107 = por %p105, %p106
      %p108 = scmp.ne.s32.totalorder %s96, %s97
      %p109 = scmp.eq.s32.totalorder %s24, 1
      %p110 = por %p108, %p109
      %p112 = scmp.ne.s32.totalorder %s97, %s111
      %p113 = scmp.eq.s32.totalorder %s24, 0
      %p114 = por %p112, %p113
      %s115 = ssub.s32 %s18, %s25
      %p116 = scmp.eq.s32.totalorder %s115, 0
      %s118 = sadd.s32 %s117, 1
      %s119 = scalar_select %p116, %s117, %s118
      %p122 = pneg %p116
      %p123 = scmp.eq.s32.totalorder %s18, 1
      %p124 = por %p122, %p123
      %p125 = scmp.ne.s32.totalorder %s117, %s120
      %p126 = scmp.eq.s32.totalorder %s18, 0
      %p127 = por %p125, %p126
      %p128 = scmp.ne.s32.totalorder %s117, %s120
      %p129 = scmp.eq.s32.totalorder %s23, 1
      %p130 = por %p128, %p129
      %p131 = scmp.ne.s32.totalorder %s120, %s121
      %p132 = scmp.eq.s32.totalorder %s23, 0
      %p133 = por %p131, %p132
      %p134 = scmp.ne.s32.totalorder %s120, %s121
      %p135 = scmp.eq.s32.totalorder %s24, 1
      %p136 = por %p134, %p135
      %p138 = scmp.ne.s32.totalorder %s121, %s137
      %p139 = scmp.eq.s32.totalorder %s24, 0
      %p140 = por %p138, %p139
      %s141 = ssub.s32 %s18, %s25
      %p142 = scmp.eq.s32.totalorder %s141, 0
      %s144 = sadd.s32 %s143, 1
      %s145 = scalar_select %p142, %s143, %s144
      %p148 = pneg %p142
      %p149 = scmp.eq.s32.totalorder %s18, 1
      %p150 = por %p148, %p149
      %p151 = scmp.ne.s32.totalorder %s143, %s146
      %p152 = scmp.eq.s32.totalorder %s18, 0
      %p153 = por %p151, %p152
      %p154 = scmp.ne.s32.totalorder %s143, %s146
      %p155 = scmp.eq.s32.totalorder %s23, 1
      %p156 = por %p154, %p155
      %p157 = scmp.ne.s32.totalorder %s146, %s147
      %p158 = scmp.eq.s32.totalorder %s23, 0
      %p159 = por %p157, %p158
      %p160 = scmp.ne.s32.totalorder %s146, %s147
      %p161 = scmp.eq.s32.totalorder %s24, 1
      %p162 = por %p160, %p161
      %p164 = scmp.ne.s32.totalorder %s147, %s163
      %p165 = scmp.eq.s32.totalorder %s24, 0
      %p166 = por %p164, %p165
      %p167 = scmp.le.s32.totalorder 1, %s18
      %p168 = scmp.lt.s32.totalorder %s18, 3
      %p169 = pnand %p167, %p168
      %p170 = pneg %p169
      // Predicated region
      $region9: #{tpu_custom_call.1} parent=5 // pred_check
        _
      $region10: #{tpu_custom_call.1} parent=5 // pred_check_branch
        %172 = sbr.rel (%p169) target = $region12
      $region11: #{tpu_custom_call.1} parent=5 // pred_region
        %s173 = ssub.s32 %s18, 1
        // Predicated region
        $region13: #{tpu_custom_call.1} parent=11 // pred_check
          %p174 = pneg %p65
        $region14: #{tpu_custom_call.1} parent=11 // pred_check_branch
          %176 = sbr.rel (%p174) target = $region16
        $region15: #{tpu_custom_call.1} parent=11 // pred_region
          _
        $region16: #{tpu_custom_call.1} parent=11 // pred_fallthru
          _
        // Predicated region
        $region17: #{tpu_custom_call.1} parent=11 // pred_check
          %p177 = pneg %p86
        $region18: #{tpu_custom_call.1} parent=11 // pred_check_branch
          %179 = sbr.rel (%p177) target = $region20
        $region19: #{tpu_custom_call.1} parent=11 // pred_region
          _
        $region20: #{tpu_custom_call.1} parent=11 // pred_fallthru
          _
        // Predicated region
        $region21: #{tpu_custom_call.1} parent=11 // pred_check
          %p180 = pneg %p107
        $region22: #{tpu_custom_call.1} parent=11 // pred_check_branch
          %182 = sbr.rel (%p180) target = $region24
        $region23: #{tpu_custom_call.1} parent=11 // pred_region
          _
        $region24: #{tpu_custom_call.1} parent=11 // pred_fallthru
          _
      $region12: #{tpu_custom_call.1} parent=5 // pred_fallthru
        _
      %p183 = scmp.lt.s32.totalorder %s18, 2
      // Predicated region
      $region25: #{tpu_custom_call.1} parent=5 // pred_check
        %p184 = pneg %p183
      $region26: #{tpu_custom_call.1} parent=5 // pred_check_branch
        %186 = sbr.rel (%p184) target = $region28
      $region27: #{tpu_custom_call.1} parent=5 // pred_region
        // Predicated region
        $region29: #{tpu_custom_call.1} parent=27 // pred_check
          %p187 = pneg %p38
        $region30: #{tpu_custom_call.1} parent=27 // pred_check_branch
          %189 = sbr.rel (%p187) target = $region32
        $region31: #{tpu_custom_call.1} parent=27 // pred_region
          %p190 = scmp.lt.s32.totalorder %s18, 1
          %s191 = scalar_select %p190, %s18, 1
          %s192 = smul.addr %s191, 8
          %s193 = scalar_lea.vmem %s0, %s192
        $region32: #{tpu_custom_call.1} parent=27 // pred_fallthru
          _
      $region28: #{tpu_custom_call.1} parent=5 // pred_fallthru
        _
      %p194 = scmp.le.s32.totalorder 1, %s18
      %p195 = scmp.lt.s32.totalorder %s18, 3
      %p196 = pnand %p194, %p195
      %p197 = pneg %p196
      // Predicated region
      $region33: #{tpu_custom_call.1} parent=5 // pred_check
        _
      $region34: #{tpu_custom_call.1} parent=5 // pred_check_branch
        %199 = sbr.rel (%p196) target = $region36
      $region35: #{tpu_custom_call.1} parent=5 // pred_region
        %s200 = ssub.s32 %s18, 1
        %p201 = scmp.lt.s32.totalorder %s23, 1
        %s202 = scalar_select %p201, %s23, 1
        %s203 = smul.addr %s202, 8
        %s204 = scalar_lea.vmem %s0, %s203
        %p205 = pneg %p44
        %p206 = pneg %p41
        %p207 = pneg %p65
        %p208 = pneg %p62
        %p209 = pneg %p86
        %p210 = pneg %p83
        %p211 = pneg %p107
        %p212 = pneg %p104
        %p213 = pneg %p133
        %p214 = pneg %p130
        %s215 = sand.u32 %s120, 1
        %s216 = scalar_lea.sflag [#allocation3], %s215
        %s217 = sand.u32 %s120, 1
        %s218 = smul.addr %s217, 8
        %s219 = scalar_lea.vmem [#allocation2], %s218
        %p220 = pneg %p159
        %p221 = pneg %p156
        %s222 = sand.u32 %s146, 1
        %s223 = scalar_lea.sflag [#allocation5], %s222
        %s224 = sand.u32 %s146, 1
        %s225 = smul.addr %s224, 8
        %s226 = scalar_lea.vmem [#allocation4], %s225
        %p227 = scmp.lt.s32.totalorder %s23, 1
        %s228 = scalar_select %p227, %s23, 1
        %s229 = smul.addr %s228, 8
        %s230 = scalar_lea.vmem %s0, %s229
        %v231 = vld [vmem:[%s230] sm:$0xff]
        %v232 = vld [vmem:[%s1] sm:$0xff]
        %v233 = vld [vmem:[%s1 + $0x8] sm:$0xff]
        %v234 = vld [vmem:[%s1 + $0x10] sm:$0xff]
        %v235 = vld [vmem:[%s1 + $0x18] sm:$0xff]
        %v236 = vld [vmem:[%s1 + $0x20] sm:$0xff]
        %v237 = vld [vmem:[%s1 + $0x28] sm:$0xff]
        %v238 = vld [vmem:[%s1 + $0x30] sm:$0xff]
        %v239 = vld [vmem:[%s1 + $0x38] sm:$0xff]
        %v240 = vld [vmem:[%s2] sm:$0x1]
        %v242 = vperm.slane %v240, 0
        %vm244 = vcmask 523264
        %v246 = vsel %vm244, %v231, 0
        %248 = vmatpush.msra.mxu0 0.0
        %249 = vmatpush.msra.mxu0 0.0
        %250 = vmatpush.msra.mxu0 0.0
        %251 = vmatpush.msra.mxu0 0.0
        %252 = vmatpush.msra.mxu0 0.0
        %253 = vmatpush.msra.mxu0 0.0
        %254 = vmatpush.msra.mxu0 0.0
        %255 = vmatpush.msra.mxu0 0.0
        %256 = vmatpush.msra.mxu0 %v239
        %257 = vmatpush.msra.mxu0 %v238
        %258 = vmatpush.msra.mxu0 %v237
        %259 = vmatpush.msra.mxu0 %v236
        %260 = vmatpush.msra.mxu0 %v235
        %261 = vmatpush.msra.mxu0 %v234
        %262 = vmatpush.msra.mxu0 %v233
        %263 = vmatpush.msra.mxu0 %v232
        %264 = vmatmul.f32.gmra.mxu0 %v246
        %v265 = vpop.f32.mrf.mxu0
        %v266 = vadd.f32 %v242, %v265
        %267 = vdwg.mxu0
        %v268 = vlaneseq
        %v269 = vand.u32 %v268, 127
        %vm270 = vcmask 130048
        %v271 = vsel %vm270, %v266, -inf
        %272 = vmax.xlane.f32.xlu0 %v271
        %v273 = vpop.xlane.xlu0 %272
        %v274 = vsub.f32 %v266, %v273
        %v275 = vmul.f32 %v274, 1.442695
        %v276 = vpow.pop %v275
        %v277 = vsel %vm270, %v276, 0.0
        %278 = vadd.xlane.f32.xlu0 %v277
        %v279 = vpop.xlane.xlu0 %278
        %v280 = vrcp.pop %v279
        %v281 = vmul.f32 %v279, %v280
        %v282 = vsub.f32 1.0, %v281
        %v283 = vmul.f32 %v280, %v282
        %v284 = vadd.f32 %v280, %v283
        %vm285 = vweird.f32 %v279
        %vm286 = vweird.f32 %v280
        %vm287 = vmor %vm285, %vm286
        %v288 = vsel %vm287, %v280, %v284
        %v289 = vand.u32 2147483647, %v279
        %vm290 = vcmp.eq.f32.partialorder %v289, 8.507059e+37
        %v291 = vand.u32 %v279, 2147483648
        %v292 = vor.u32 1.1754944e-38, %v291
        %v293 = vsel %vm290, %v292, %v288
        %v294 = vmul.f32 %v276, %v293
        %v295 = vld [vmem:[%s3] sm:$0x1]
        %v297 = vperm.slane %v295, 0
        %v299 = vadd.f32 %v294, %v297
        %v300 = vsel %vm270, %v299, -inf
        %301 = vmax.xlane.f32.xlu0 %v300
        %v302 = vpop.xlane.xlu0 %301
        %vm303 = vcmp.eq.f32.partialorder %v299, %v302
        %v304 = vsel %vm303, %v269, 16
        %v305 = vsel %vm270, %v304, 2147483647
        %v306 = vand.u32 %v305, 65535
        %v307 = vshra.s32 %v305, 16
        %v308 = vcvt.s32.f32 %v306
        %v309 = vcvt.s32.f32 %v307
        %310 = vmin.xlane.f32.xlu0 %v309
        %v311 = vpop.xlane.xlu0 %310
        %vm312 = vcmp.eq.f32.partialorder %v309, %v311
        %v313 = vsel %vm312, %v308, inf
        %314 = vmin.xlane.f32.xlu0 %v313
        %v315 = vpop.xlane.xlu0 %314
        %v316 = vcvt.f32.s32 %v315
        %v317 = vcvt.f32.s32 %v311
        %v318 = vshll.u32 %v317, 16
        %v319 = vadd.s32 %v318, %v316
        %vm320 = vcmp.eq.s32.totalorder %v269, %v319
        %v321 = vsel %vm320, -inf, %v299
        %v322 = vsel %vm320, %v294, 0.0
        %v323 = vsel %vm270, %v322, 0.0
        %324 = vadd.xlane.f32.xlu0 %v323
        %v325 = vpop.xlane.xlu0 %324
        %v326 = vsel %vm270, %v321, -inf
        %327 = vmax.xlane.f32.xlu0 %v326
        %v328 = vpop.xlane.xlu0 %327
        %vm329 = vcmp.eq.f32.partialorder %v321, %v328
        %v330 = vsel %vm329, %v269, 16
        %v331 = vsel %vm270, %v330, 2147483647
        %v332 = vand.u32 %v331, 65535
        %v333 = vshra.s32 %v331, 16
        %v334 = vcvt.s32.f32 %v332
        %v335 = vcvt.s32.f32 %v333
        %336 = vmin.xlane.f32.xlu0 %v335
        %v337 = vpop.xlane.xlu0 %336
        %vm338 = vcmp.eq.f32.partialorder %v335, %v337
        %v339 = vsel %vm338, %v334, inf
        %340 = vmin.xlane.f32.xlu0 %v339
        %v341 = vpop.xlane.xlu0 %340
        %v342 = vcvt.f32.s32 %v341
        %v343 = vcvt.f32.s32 %v337
        %v344 = vshll.u32 %v343, 16
        %v345 = vadd.s32 %v344, %v342
        %vm346 = vcmp.eq.s32.totalorder %v269, %v345
        %v347 = vsel %vm346, -inf, %v321
        %v348 = vsel %vm346, %v294, 0.0
        %v349 = vsel %vm270, %v348, 0.0
        %350 = vadd.xlane.f32.xlu0 %v349
        %v351 = vpop.xlane.xlu0 %350
        %v352 = vsel %vm270, %v347, -inf
        %353 = vmax.xlane.f32.xlu0 %v352
        %v354 = vpop.xlane.xlu0 %353
        %vm355 = vcmp.eq.f32.partialorder %v347, %v354
        %v356 = vsel %vm355, %v269, 16
        %v357 = vsel %vm270, %v356, 2147483647
        %v358 = vand.u32 %v357, 65535
        %v359 = vshra.s32 %v357, 16
        %v360 = vcvt.s32.f32 %v358
        %v361 = vcvt.s32.f32 %v359
        %362 = vmin.xlane.f32.xlu0 %v361
        %v363 = vpop.xlane.xlu0 %362
        %vm364 = vcmp.eq.f32.partialorder %v361, %v363
        %v365 = vsel %vm364, %v360, inf
        %366 = vmin.xlane.f32.xlu0 %v365
        %v367 = vpop.xlane.xlu0 %366
        %v368 = vcvt.f32.s32 %v367
        %v369 = vcvt.f32.s32 %v363
        %v370 = vshll.u32 %v369, 16
        %v371 = vadd.s32 %v370, %v368
        %vm372 = vcmp.eq.s32.totalorder %v269, %v371
        %v373 = vsel %vm372, -inf, %v347
        %v374 = vsel %vm372, %v294, 0.0
        %v375 = vsel %vm270, %v374, 0.0
        %376 = vadd.xlane.f32.xlu0 %v375
        %v377 = vpop.xlane.xlu0 %376
        %v378 = vsel %vm270, %v373, -inf
        %379 = vmax.xlane.f32.xlu0 %v378
        %v380 = vpop.xlane.xlu0 %379
        %vm381 = vcmp.eq.f32.partialorder %v373, %v380
        %v382 = vsel %vm381, %v269, 16
        %v383 = vsel %vm270, %v382, 2147483647
        %v384 = vand.u32 %v383, 65535
        %v385 = vshra.s32 %v383, 16
        %v386 = vcvt.s32.f32 %v384
        %v387 = vcvt.s32.f32 %v385
        %388 = vmin.xlane.f32.xlu0 %v387
        %v389 = vpop.xlane.xlu0 %388
        %vm390 = vcmp.eq.f32.partialorder %v387, %v389
        %v391 = vsel %vm390, %v386, inf
        %392 = vmin.xlane.f32.xlu0 %v391
        %v393 = vpop.xlane.xlu0 %392
        %v394 = vcvt.f32.s32 %v393
        %v395 = vcvt.f32.s32 %v389
        %v396 = vshll.u32 %v395, 16
        %v397 = vadd.s32 %v396, %v394
        %vm398 = vcmp.eq.s32.totalorder %v269, %v397
        %v399 = vsel %vm398, %v294, 0.0
        %v400 = vsel %vm270, %v399, 0.0
        %401 = vadd.xlane.f32.xlu0 %v400
        %v402 = vpop.xlane.xlu0 %401
        %vm403 = vcmask 7168
        %v404 = vsel %vm403, %v325, %v351
        %vm405 = vcmask 15360
        %v406 = vsel %vm405, %v404, %v377
        %vm407 = vcmask 23552
        %v408 = vsel %vm407, %v406, %v402
        %v409 = vsel %vm403, %v319, %v345
        %v410 = vsel %vm405, %v409, %v371
        %v411 = vsel %vm407, %v410, %v397
        %v412 = vmul.f32 %v408, 1.5
        %vm413 = vcmask 31744
        %v414 = vsel %vm413, %v412, 0.0
        %v415 = vsel %vm413, %v411, 0
        %416 = vst [vmem:[%s219] sm:$0xff] %v414
        %417 = vst [vmem:[%s226] sm:$0xff] %v415
        %s418 = sand.u32 %s120, 1
        %s419 = scalar_lea.sflag [#allocation3], %s418
        %s420 = sand.u32 %s120, 1
        %s421 = smul.addr %s420, 8
        %s422 = scalar_lea.vmem [#allocation2], %s421
        %s423 = sand.u32 %s146, 1
        %s424 = scalar_lea.sflag [#allocation5], %s423
        %s425 = sand.u32 %s146, 1
        %s426 = smul.addr %s425, 8
        %s427 = scalar_lea.vmem [#allocation4], %s426
        // Predicated region
        $region37: #{tpu_custom_call.1} parent=35 // pred_check
          %p428 = pneg %p130
        $region38: #{tpu_custom_call.1} parent=35 // pred_check_branch
          %430 = sbr.rel (%p428) target = $region40
        $region39: #{tpu_custom_call.1} parent=35 // pred_region
          %432 = vsyncadd %s419, 0
          %s433 = smul.addr %s23, 8
          %s434 = scalar_lea.hbm %s4, %s433
          %s436 = sshll.u32 %s422, 4
          %s437 = int_to_ptr.vmem [resolvable:$true] %s436
          %s438 = sshll.u32 %s434, 4
          %s439 = int_to_ptr.hbm [resolvable:$true] %s438
          %441 = dma.vmem_to_hbm [thread:$0]  %s437, 128, %s439, %s419
        $region40: #{tpu_custom_call.1} parent=35 // pred_fallthru
          _
        // Predicated region
        $region41: #{tpu_custom_call.1} parent=35 // pred_check
          %p442 = pneg %p156
        $region42: #{tpu_custom_call.1} parent=35 // pred_check_branch
          %444 = sbr.rel (%p442) target = $region44
        $region43: #{tpu_custom_call.1} parent=35 // pred_region
          %446 = vsyncadd %s424, 0
          %s447 = smul.addr %s23, 8
          %s448 = scalar_lea.hbm %s5, %s447
          %s450 = sshll.u32 %s427, 4
          %s451 = int_to_ptr.vmem [resolvable:$true] %s450
          %s452 = sshll.u32 %s448, 4
          %s453 = int_to_ptr.hbm [resolvable:$true] %s452
          %455 = dma.vmem_to_hbm [thread:$0]  %s451, 128, %s453, %s424
        $region44: #{tpu_custom_call.1} parent=35 // pred_fallthru
          _
      $region36: #{tpu_custom_call.1} parent=5 // pred_fallthru
        _
      %p456 = scmp.le.s32.totalorder 2, %s18
      // Predicated region
      $region45: #{tpu_custom_call.1} parent=5 // pred_check
        %p457 = pneg %p456
      $region46: #{tpu_custom_call.1} parent=5 // pred_check_branch
        %459 = sbr.rel (%p457) target = $region48
      $region47: #{tpu_custom_call.1} parent=5 // pred_region
        %s460 = ssub.s32 %s18, 2
        // Predicated region
        $region49: #{tpu_custom_call.1} parent=47 // pred_check
          %p461 = pneg %p136
        $region50: #{tpu_custom_call.1} parent=47 // pred_check_branch
          %463 = sbr.rel (%p461) target = $region52
        $region51: #{tpu_custom_call.1} parent=47 // pred_region
          %s464 = sand.u32 %s121, 1
          %s465 = scalar_lea.sflag [#allocation3], %s464
          %s466 = sand.u32 %s121, 1
          %s467 = smul.addr %s466, 8
          %s468 = scalar_lea.vmem [#allocation2], %s467
          %470 = dma.done %s465, 128
        $region52: #{tpu_custom_call.1} parent=47 // pred_fallthru
          _
        // Predicated region
        $region53: #{tpu_custom_call.1} parent=47 // pred_check
          %p471 = pneg %p162
        $region54: #{tpu_custom_call.1} parent=47 // pred_check_branch
          %473 = sbr.rel (%p471) target = $region56
        $region55: #{tpu_custom_call.1} parent=47 // pred_region
          %s474 = sand.u32 %s147, 1
          %s475 = scalar_lea.sflag [#allocation5], %s474
          %s476 = sand.u32 %s147, 1
          %s477 = smul.addr %s476, 8
          %s478 = scalar_lea.vmem [#allocation4], %s477
          %480 = dma.done %s475, 128
        $region56: #{tpu_custom_call.1} parent=47 // pred_fallthru
          _
      $region48: #{tpu_custom_call.1} parent=5 // pred_fallthru
        _
    $region6: #{tpu_custom_call.1} parent=1 // loop_footer
      %s22 = sadd.s32 1, %s18
    $region7: #{tpu_custom_call.1} parent=1 // loop_footer_branch
      %17 = sbr.rel target = $region3
    $region8: #{tpu_custom_call.1} parent=1 // loop_exit
      _
    %481 = vsyncpa [#allocation3], 1
    %s482 = scalar_lea.sflag [#allocation3], 1
    %483 = vsyncpa %s482, 1
    %484 = vsyncpa [#allocation5], 1
    %s485 = scalar_lea.sflag [#allocation5], 1
    %486 = vsyncpa %s485, 1

// kernel: tpu_custom_call.1
$region0: #{tpu_custom_call.1}
  #allocation0 [shape = 'u32[]', space=smem, size = 0x4, offset = 0x4, fixed_abs, tag = 'smem constant byte address 0x4 - core index']
  #allocation1 [shape = 'u32[72,128]{1,0:T(1,128)}', space=vmem, size = 0x9000, scoped, tag = 'internal scratch']
  %s0 = inlined_call_operand.vmem [shape: f32[16,64], index: 0, kind: input, shape index: {}]
  %s1 = inlined_call_operand.vmem [shape: f32[64,16], index: 1, kind: input, shape index: {}]
  %s2 = inlined_call_operand.vmem [shape: f32[1,16], index: 2, kind: input, shape index: {}]
  %s3 = inlined_call_operand.vmem [shape: f32[1,16], index: 3, kind: input, shape index: {}]
  %s4 = inlined_call_operand.hbm [shape: f32[16,128], index: 4, kind: output, shape index: {0}]
  %s5 = inlined_call_operand.hbm [shape: s32[16,128], index: 5, kind: output, shape index: {1}]
  %6 = xla_tuple %s4, %s5
  %s7 = sld [smem:[#allocation0]]
  $region57: #{tpu_custom_call.1} parent=0
    _
  %s9 = ssub.s32 1, %s7
  %s10 = scalar_select 0, %s9, %s7
  $region1: #{tpu_custom_call.1} parent=0
    #allocation2 [shape = 'u8[8192]{0}', space=vmem, size = 0x2000, scoped, tag = 'output window, operand 0']
    #allocation3 [shape = 's32[2]{0}', space=sflag, size = 0x8, scoped, tag = 'scoped memory for tpu_custom_call.1']
    #allocation4 [shape = 'u8[8192]{0}', space=vmem, size = 0x2000, scoped, tag = 'output window, operand 1']
    #allocation5 [shape = 's32[2]{0}', space=sflag, size = 0x8, scoped, tag = 'scoped memory for tpu_custom_call.1']
    %11 = vsyncpa [#allocation3], 0
    %s12 = scalar_lea.sflag [#allocation3], 1
    %13 = vsyncpa %s12, 0
    %14 = vsyncpa [#allocation5], 0
    %s15 = scalar_lea.sflag [#allocation5], 1
    %16 = vsyncpa %s15, 0
    loop: start=0, step=1, limit=4
    $region2: #{tpu_custom_call.1} parent=1 // loop_pre_header
      _
    $region3: #{tpu_custom_call.1} parent=1 // loop_header
      %s18 = sphi 0, %s22
      %p19 = scmp.ge.s32.totalorder %s18, 4
      %s28 = sphi 0, %s30
      %s31 = sphi 0, %s28
      %s32 = sphi 0, %s31
      %s48 = sphi 0, %s32
      %s52 = sphi 0, %s52
      %s54 = sphi 0, %s52
      %s55 = sphi 0, %s54
      %s69 = sphi 0, %s55
      %s73 = sphi 0, %s73
      %s75 = sphi 0, %s73
      %s76 = sphi 0, %s75
      %s90 = sphi 0, %s76
      %s94 = sphi 0, %s94
      %s96 = sphi 0, %s94
      %s97 = sphi 0, %s96
      %s111 = sphi 0, %s97
      %s117 = sphi 0, %s119
      %s120 = sphi 0, %s117
      %s121 = sphi 0, %s120
      %s137 = sphi 0, %s121
      %s143 = sphi 0, %s145
      %s146 = sphi 0, %s143
      %s147 = sphi 0, %s146
      %s163 = sphi 0, %s147
    $region4: #{tpu_custom_call.1} parent=1 // loop_header_branch
      %21 = sbr.rel (%p19) target = $region8
    $region5: #{tpu_custom_call.1} parent=1 // loop_body
      %s23 = ssub.s32 %s18, 1
      %s24 = ssub.s32 %s18, 2
      %s25 = sadd.s32 %s18, 1
      %s26 = ssub.s32 %s18, %s25
      %p27 = scmp.eq.s32.totalorder %s26, 0
      %s29 = sadd.s32 %s28, 1
      %s30 = scalar_select %p27, %s28, %s29
      %p33 = pneg %p27
      %p34 = scmp.eq.s32.totalorder %s18, 1
      %p35 = por %p33, %p34
      %p36 = scmp.ne.s32.totalorder %s28, %s31
      %p37 = scmp.eq.s32.totalorder %s18, 0
      %p38 = por %p36, %p37
      %p39 = scmp.ne.s32.totalorder %s28, %s31
      %p40 = scmp.eq.s32.totalorder %s23, 1
      %p41 = por %p39, %p40
      %p42 = scmp.ne.s32.totalorder %s31, %s32
      %p43 = scmp.eq.s32.totalorder %s23, 0
      %p44 = por %p42, %p43
      %p45 = scmp.ne.s32.totalorder %s31, %s32
      %p46 = scmp.eq.s32.totalorder %s24, 1
      %p47 = por %p45, %p46
      %p49 = scmp.ne.s32.totalorder %s32, %s48
      %p50 = scmp.eq.s32.totalorder %s24, 0
      %p51 = por %p49, %p50
      %s53 = sadd.s32 %s52, 1
      %p56 = scmp.eq.s32.totalorder %s18, 1
      %p57 = scmp.ne.s32.totalorder %s52, %s54
      %p58 = scmp.eq.s32.totalorder %s18, 0
      %p59 = por %p57, %p58
      %p60 = scmp.ne.s32.totalorder %s52, %s54
      %p61 = scmp.eq.s32.totalorder %s23, 1
      %p62 = por %p60, %p61
      %p63 = scmp.ne.s32.totalorder %s54, %s55
      %p64 = scmp.eq.s32.totalorder %s23, 0
      %p65 = por %p63, %p64
      %p66 = scmp.ne.s32.totalorder %s54, %s55
      %p67 = scmp.eq.s32.totalorder %s24, 1
      %p68 = por %p66, %p67
      %p70 = scmp.ne.s32.totalorder %s55, %s69
      %p71 = scmp.eq.s32.totalorder %s24, 0
      %p72 = por %p70, %p71
      %s74 = sadd.s32 %s73, 1
      %p77 = scmp.eq.s32.totalorder %s18, 1
      %p78 = scmp.ne.s32.totalorder %s73, %s75
      %p79 = scmp.eq.s32.totalorder %s18, 0
      %p80 = por %p78, %p79
      %p81 = scmp.ne.s32.totalorder %s73, %s75
      %p82 = scmp.eq.s32.totalorder %s23, 1
      %p83 = por %p81, %p82
      %p84 = scmp.ne.s32.totalorder %s75, %s76
      %p85 = scmp.eq.s32.totalorder %s23, 0
      %p86 = por %p84, %p85
      %p87 = scmp.ne.s32.totalorder %s75, %s76
      %p88 = scmp.eq.s32.totalorder %s24, 1
      %p89 = por %p87, %p88
      %p91 = scmp.ne.s32.totalorder %s76, %s90
      %p92 = scmp.eq.s32.totalorder %s24, 0
      %p93 = por %p91, %p92
      %s95 = sadd.s32 %s94, 1
      %p98 = scmp.eq.s32.totalorder %s18, 1
      %p99 = scmp.ne.s32.totalorder %s94, %s96
      %p100 = scmp.eq.s32.totalorder %s18, 0
      %p101 = por %p99, %p100
      %p102 = scmp.ne.s32.totalorder %s94, %s96
      %p103 = scmp.eq.s32.totalorder %s23, 1
      %p104 = por %p102, %p103
      %p105 = scmp.ne.s32.totalorder %s96, %s97
      %p106 = scmp.eq.s32.totalorder %s23, 0
      %p107 = por %p105, %p106
      %p108 = scmp.ne.s32.totalorder %s96, %s97
      %p109 = scmp.eq.s32.totalorder %s24, 1
      %p110 = por %p108, %p109
      %p112 = scmp.ne.s32.totalorder %s97, %s111
      %p113 = scmp.eq.s32.totalorder %s24, 0
      %p114 = por %p112, %p113
      %s115 = ssub.s32 %s18, %s25
      %p116 = scmp.eq.s32.totalorder %s115, 0
      %s118 = sadd.s32 %s117, 1
      %s119 = scalar_select %p116, %s117, %s118
      %p122 = pneg %p116
      %p123 = scmp.eq.s32.totalorder %s18, 1
      %p124 = por %p122, %p123
      %p125 = scmp.ne.s32.totalorder %s117, %s120
      %p126 = scmp.eq.s32.totalorder %s18, 0
      %p127 = por %p125, %p126
      %p128 = scmp.ne.s32.totalorder %s117, %s120
      %p129 = scmp.eq.s32.totalorder %s23, 1
      %p130 = por %p128, %p129
      %p131 = scmp.ne.s32.totalorder %s120, %s121
      %p132 = scmp.eq.s32.totalorder %s23, 0
      %p133 = por %p131, %p132
      %p134 = scmp.ne.s32.totalorder %s120, %s121
      %p135 = scmp.eq.s32.totalorder %s24, 1
      %p136 = por %p134, %p135
      %p138 = scmp.ne.s32.totalorder %s121, %s137
      %p139 = scmp.eq.s32.totalorder %s24, 0
      %p140 = por %p138, %p139
      %s141 = ssub.s32 %s18, %s25
      %p142 = scmp.eq.s32.totalorder %s141, 0
      %s144 = sadd.s32 %s143, 1
      %s145 = scalar_select %p142, %s143, %s144
      %p148 = pneg %p142
      %p149 = scmp.eq.s32.totalorder %s18, 1
      %p150 = por %p148, %p149
      %p151 = scmp.ne.s32.totalorder %s143, %s146
      %p152 = scmp.eq.s32.totalorder %s18, 0
      %p153 = por %p151, %p152
      %p154 = scmp.ne.s32.totalorder %s143, %s146
      %p155 = scmp.eq.s32.totalorder %s23, 1
      %p156 = por %p154, %p155
      %p157 = scmp.ne.s32.totalorder %s146, %s147
      %p158 = scmp.eq.s32.totalorder %s23, 0
      %p159 = por %p157, %p158
      %p160 = scmp.ne.s32.totalorder %s146, %s147
      %p161 = scmp.eq.s32.totalorder %s24, 1
      %p162 = por %p160, %p161
      %p164 = scmp.ne.s32.totalorder %s147, %s163
      %p165 = scmp.eq.s32.totalorder %s24, 0
      %p166 = por %p164, %p165
      %p167 = scmp.le.s32.totalorder 1, %s18
      %p168 = scmp.lt.s32.totalorder %s18, 3
      %p169 = pnand %p167, %p168
      %p170 = pneg %p169
      // Predicated region
      $region9: #{tpu_custom_call.1} parent=5 // pred_check
        _
      $region10: #{tpu_custom_call.1} parent=5 // pred_check_branch
        %172 = sbr.rel (%p169) target = $region12
      $region11: #{tpu_custom_call.1} parent=5 // pred_region
        %s173 = ssub.s32 %s18, 1
        // Predicated region
        $region13: #{tpu_custom_call.1} parent=11 // pred_check
          %p174 = pneg %p65
        $region14: #{tpu_custom_call.1} parent=11 // pred_check_branch
          %176 = sbr.rel (%p174) target = $region16
        $region15: #{tpu_custom_call.1} parent=11 // pred_region
          _
        $region16: #{tpu_custom_call.1} parent=11 // pred_fallthru
          _
        // Predicated region
        $region17: #{tpu_custom_call.1} parent=11 // pred_check
          %p177 = pneg %p86
        $region18: #{tpu_custom_call.1} parent=11 // pred_check_branch
          %179 = sbr.rel (%p177) target = $region20
        $region19: #{tpu_custom_call.1} parent=11 // pred_region
          _
        $region20: #{tpu_custom_call.1} parent=11 // pred_fallthru
          _
        // Predicated region
        $region21: #{tpu_custom_call.1} parent=11 // pred_check
          %p180 = pneg %p107
        $region22: #{tpu_custom_call.1} parent=11 // pred_check_branch
          %182 = sbr.rel (%p180) target = $region24
        $region23: #{tpu_custom_call.1} parent=11 // pred_region
          _
        $region24: #{tpu_custom_call.1} parent=11 // pred_fallthru
          _
      $region12: #{tpu_custom_call.1} parent=5 // pred_fallthru
        _
      %p183 = scmp.lt.s32.totalorder %s18, 2
      // Predicated region
      $region25: #{tpu_custom_call.1} parent=5 // pred_check
        %p184 = pneg %p183
      $region26: #{tpu_custom_call.1} parent=5 // pred_check_branch
        %186 = sbr.rel (%p184) target = $region28
      $region27: #{tpu_custom_call.1} parent=5 // pred_region
        // Predicated region
        $region29: #{tpu_custom_call.1} parent=27 // pred_check
          %p187 = pneg %p38
        $region30: #{tpu_custom_call.1} parent=27 // pred_check_branch
          %189 = sbr.rel (%p187) target = $region32
        $region31: #{tpu_custom_call.1} parent=27 // pred_region
          %p190 = scmp.lt.s32.totalorder %s18, 1
          %s191 = scalar_select %p190, %s18, 1
          %s192 = smul.addr %s191, 8
          %s193 = scalar_lea.vmem %s0, %s192
        $region32: #{tpu_custom_call.1} parent=27 // pred_fallthru
          _
      $region28: #{tpu_custom_call.1} parent=5 // pred_fallthru
        _
      %p194 = scmp.le.s32.totalorder 1, %s18
      %p195 = scmp.lt.s32.totalorder %s18, 3
      %p196 = pnand %p194, %p195
      %p197 = pneg %p196
      // Predicated region
      $region33: #{tpu_custom_call.1} parent=5 // pred_check
        _
      $region34: #{tpu_custom_call.1} parent=5 // pred_check_branch
        %199 = sbr.rel (%p196) target = $region36
      $region35: #{tpu_custom_call.1} parent=5 // pred_region
        %s200 = ssub.s32 %s18, 1
        %p201 = scmp.lt.s32.totalorder %s23, 1
        %s202 = scalar_select %p201, %s23, 1
        %s203 = smul.addr %s202, 8
        %s204 = scalar_lea.vmem %s0, %s203
        %p205 = pneg %p44
        %p206 = pneg %p41
        %p207 = pneg %p65
        %p208 = pneg %p62
        %p209 = pneg %p86
        %p210 = pneg %p83
        %p211 = pneg %p107
        %p212 = pneg %p104
        %p213 = pneg %p133
        %p214 = pneg %p130
        %s215 = sand.u32 %s120, 1
        %s216 = scalar_lea.sflag [#allocation3], %s215
        %s217 = sand.u32 %s120, 1
        %s218 = smul.addr %s217, 8
        %s219 = scalar_lea.vmem [#allocation2], %s218
        %p220 = pneg %p159
        %p221 = pneg %p156
        %s222 = sand.u32 %s146, 1
        %s223 = scalar_lea.sflag [#allocation5], %s222
        %s224 = sand.u32 %s146, 1
        %s225 = smul.addr %s224, 8
        %s226 = scalar_lea.vmem [#allocation4], %s225
        %p227 = scmp.lt.s32.totalorder %s23, 1
        %s228 = scalar_select %p227, %s23, 1
        %s229 = smul.addr %s228, 8
        %s230 = scalar_lea.vmem %s0, %s229
        %v231 = vld [vmem:[%s230] sm:$0xff]
        %v232 = vld [vmem:[%s1] sm:$0xff]
        %v233 = vld [vmem:[%s1 + $0x8] sm:$0xff]
        %v234 = vld [vmem:[%s1 + $0x10] sm:$0xff]
        %v235 = vld [vmem:[%s1 + $0x18] sm:$0xff]
        %v236 = vld [vmem:[%s1 + $0x20] sm:$0xff]
        %v237 = vld [vmem:[%s1 + $0x28] sm:$0xff]
        %v238 = vld [vmem:[%s1 + $0x30] sm:$0xff]
        %v239 = vld [vmem:[%s1 + $0x38] sm:$0xff]
        %v240 = vld [vmem:[%s2] sm:$0x1]
        %v242 = vperm.slane %v240, 0
        %vm244 = vcmask 523264
        %v246 = vsel %vm244, %v231, 0
        %248 = vmatpush.msra.mxu0 0.0
        %249 = vmatpush.msra.mxu0 0.0
        %250 = vmatpush.msra.mxu0 0.0
        %251 = vmatpush.msra.mxu0 0.0
        %252 = vmatpush.msra.mxu0 0.0
        %253 = vmatpush.msra.mxu0 0.0
        %254 = vmatpush.msra.mxu0 0.0
        %255 = vmatpush.msra.mxu0 0.0
        %256 = vmatpush.msra.mxu0 %v239
        %257 = vmatpush.msra.mxu0 %v238
        %258 = vmatpush.msra.mxu0 %v237
        %259 = vmatpush.msra.mxu0 %v236
        %260 = vmatpush.msra.mxu0 %v235
        %261 = vmatpush.msra.mxu0 %v234
        %262 = vmatpush.msra.mxu0 %v233
        %263 = vmatpush.msra.mxu0 %v232
        %264 = vmatmul.f32.gmra.mxu0 %v246
        %v265 = vpop.f32.mrf.mxu0
        %v266 = vadd.f32 %v242, %v265
        %267 = vdwg.mxu0
        %v268 = vlaneseq
        %v269 = vand.u32 %v268, 127
        %vm270 = vcmask 130048
        %v271 = vsel %vm270, %v266, -inf
        %272 = vmax.xlane.f32.xlu0 %v271
        %v273 = vpop.xlane.xlu0 %272
        %v274 = vsub.f32 %v266, %v273
        %v275 = vmul.f32 %v274, 1.442695
        %v276 = vpow.pop %v275
        %v277 = vsel %vm270, %v276, 0.0
        %278 = vadd.xlane.f32.xlu0 %v277
        %v279 = vpop.xlane.xlu0 %278
        %v280 = vrcp.pop %v279
        %v281 = vmul.f32 %v279, %v280
        %v282 = vsub.f32 1.0, %v281
        %v283 = vmul.f32 %v280, %v282
        %v284 = vadd.f32 %v280, %v283
        %vm285 = vweird.f32 %v279
        %vm286 = vweird.f32 %v280
        %vm287 = vmor %vm285, %vm286
        %v288 = vsel %vm287, %v280, %v284
        %v289 = vand.u32 2147483647, %v279
        %vm290 = vcmp.eq.f32.partialorder %v289, 8.507059e+37
        %v291 = vand.u32 %v279, 2147483648
        %v292 = vor.u32 1.1754944e-38, %v291
        %v293 = vsel %vm290, %v292, %v288
        %v294 = vmul.f32 %v276, %v293
        %v295 = vld [vmem:[%s3] sm:$0x1]
        %v297 = vperm.slane %v295, 0
        %v299 = vadd.f32 %v294, %v297
        %v300 = vsel %vm270, %v299, -inf
        %301 = vmax.xlane.f32.xlu0 %v300
        %v302 = vpop.xlane.xlu0 %301
        %vm303 = vcmp.eq.f32.partialorder %v299, %v302
        %v304 = vsel %vm303, %v269, 16
        %v305 = vsel %vm270, %v304, 2147483647
        %v306 = vand.u32 %v305, 65535
        %v307 = vshra.s32 %v305, 16
        %v308 = vcvt.s32.f32 %v306
        %v309 = vcvt.s32.f32 %v307
        %310 = vmin.xlane.f32.xlu0 %v309
        %v311 = vpop.xlane.xlu0 %310
        %vm312 = vcmp.eq.f32.partialorder %v309, %v311
        %v313 = vsel %vm312, %v308, inf
        %314 = vmin.xlane.f32.xlu0 %v313
        %v315 = vpop.xlane.xlu0 %314
        %v316 = vcvt.f32.s32 %v315
        %v317 = vcvt.f32.s32 %v311
        %v318 = vshll.u32 %v317, 16
        %v319 = vadd.s32 %v318, %v316
        %vm320 = vcmp.eq.s32.totalorder %v269, %v319
        %v321 = vsel %vm320, -inf, %v299
        %v322 = vsel %vm320, %v294, 0.0
        %v323 = vsel %vm270, %v322, 0.0
        %324 = vadd.xlane.f32.xlu0 %v323
        %v325 = vpop.xlane.xlu0 %324
        %v326 = vsel %vm270, %v321, -inf
        %327 = vmax.xlane.f32.xlu0 %v326
        %v328 = vpop.xlane.xlu0 %327
        %vm329 = vcmp.eq.f32.partialorder %v321, %v328
        %v330 = vsel %vm329, %v269, 16
        %v331 = vsel %vm270, %v330, 2147483647
        %v332 = vand.u32 %v331, 65535
        %v333 = vshra.s32 %v331, 16
        %v334 = vcvt.s32.f32 %v332
        %v335 = vcvt.s32.f32 %v333
        %336 = vmin.xlane.f32.xlu0 %v335
        %v337 = vpop.xlane.xlu0 %336
        %vm338 = vcmp.eq.f32.partialorder %v335, %v337
        %v339 = vsel %vm338, %v334, inf
        %340 = vmin.xlane.f32.xlu0 %v339
        %v341 = vpop.xlane.xlu0 %340
        %v342 = vcvt.f32.s32 %v341
        %v343 = vcvt.f32.s32 %v337
        %v344 = vshll.u32 %v343, 16
        %v345 = vadd.s32 %v344, %v342
        %vm346 = vcmp.eq.s32.totalorder %v269, %v345
        %v347 = vsel %vm346, -inf, %v321
        %v348 = vsel %vm346, %v294, 0.0
        %v349 = vsel %vm270, %v348, 0.0
        %350 = vadd.xlane.f32.xlu0 %v349
        %v351 = vpop.xlane.xlu0 %350
        %v352 = vsel %vm270, %v347, -inf
        %353 = vmax.xlane.f32.xlu0 %v352
        %v354 = vpop.xlane.xlu0 %353
        %vm355 = vcmp.eq.f32.partialorder %v347, %v354
        %v356 = vsel %vm355, %v269, 16
        %v357 = vsel %vm270, %v356, 2147483647
        %v358 = vand.u32 %v357, 65535
        %v359 = vshra.s32 %v357, 16
        %v360 = vcvt.s32.f32 %v358
        %v361 = vcvt.s32.f32 %v359
        %362 = vmin.xlane.f32.xlu0 %v361
        %v363 = vpop.xlane.xlu0 %362
        %vm364 = vcmp.eq.f32.partialorder %v361, %v363
        %v365 = vsel %vm364, %v360, inf
        %366 = vmin.xlane.f32.xlu0 %v365
        %v367 = vpop.xlane.xlu0 %366
        %v368 = vcvt.f32.s32 %v367
        %v369 = vcvt.f32.s32 %v363
        %v370 = vshll.u32 %v369, 16
        %v371 = vadd.s32 %v370, %v368
        %vm372 = vcmp.eq.s32.totalorder %v269, %v371
        %v373 = vsel %vm372, -inf, %v347
        %v374 = vsel %vm372, %v294, 0.0
        %v375 = vsel %vm270, %v374, 0.0
        %376 = vadd.xlane.f32.xlu0 %v375
        %v377 = vpop.xlane.xlu0 %376
        %v378 = vsel %vm270, %v373, -inf
        %379 = vmax.xlane.f32.xlu0 %v378
        %v380 = vpop.xlane.xlu0 %379
        %vm381 = vcmp.eq.f32.partialorder %v373, %v380
        %v382 = vsel %vm381, %v269, 16
        %v383 = vsel %vm270, %v382, 2147483647
        %v384 = vand.u32 %v383, 65535
        %v385 = vshra.s32 %v383, 16
        %v386 = vcvt.s32.f32 %v384
        %v387 = vcvt.s32.f32 %v385
        %388 = vmin.xlane.f32.xlu0 %v387
        %v389 = vpop.xlane.xlu0 %388
        %vm390 = vcmp.eq.f32.partialorder %v387, %v389
        %v391 = vsel %vm390, %v386, inf
        %392 = vmin.xlane.f32.xlu0 %v391
        %v393 = vpop.xlane.xlu0 %392
        %v394 = vcvt.f32.s32 %v393
        %v395 = vcvt.f32.s32 %v389
        %v396 = vshll.u32 %v395, 16
        %v397 = vadd.s32 %v396, %v394
        %vm398 = vcmp.eq.s32.totalorder %v269, %v397
        %v399 = vsel %vm398, %v294, 0.0
        %v400 = vsel %vm270, %v399, 0.0
        %401 = vadd.xlane.f32.xlu0 %v400
        %v402 = vpop.xlane.xlu0 %401
        %vm403 = vcmask 7168
        %v404 = vsel %vm403, %v325, %v351
        %vm405 = vcmask 15360
        %v406 = vsel %vm405, %v404, %v377
        %vm407 = vcmask 23552
        %v408 = vsel %vm407, %v406, %v402
        %v409 = vsel %vm403, %v319, %v345
        %v410 = vsel %vm405, %v409, %v371
        %v411 = vsel %vm407, %v410, %v397
        %v412 = vmul.f32 %v408, 1.5
        %vm413 = vcmask 31744
        %v414 = vsel %vm413, %v412, 0.0
        %v415 = vsel %vm413, %v411, 0
        %416 = vst [vmem:[%s219] sm:$0xff] %v414
        %417 = vst [vmem:[%s226] sm:$0xff] %v415
        %s418 = sand.u32 %s120, 1
        %s419 = scalar_lea.sflag [#allocation3], %s418
        %s420 = sand.u32 %s120, 1
        %s421 = smul.addr %s420, 8
        %s422 = scalar_lea.vmem [#allocation2], %s421
        %s423 = sand.u32 %s146, 1
        %s424 = scalar_lea.sflag [#allocation5], %s423
        %s425 = sand.u32 %s146, 1
        %s426 = smul.addr %s425, 8
        %s427 = scalar_lea.vmem [#allocation4], %s426
        // Predicated region
        $region37: #{tpu_custom_call.1} parent=35 // pred_check
          %p428 = pneg %p130
        $region38: #{tpu_custom_call.1} parent=35 // pred_check_branch
          %430 = sbr.rel (%p428) target = $region40
        $region39: #{tpu_custom_call.1} parent=35 // pred_region
          %432 = vsyncadd %s419, 0
          %s433 = smul.addr %s23, 8
          %s434 = scalar_lea.hbm %s4, %s433
          %s436 = sshll.u32 %s422, 4
          %s437 = int_to_ptr.vmem [resolvable:$true] %s436
          %s438 = sshll.u32 %s434, 4
          %s439 = int_to_ptr.hbm [resolvable:$true] %s438
          %441 = dma.vmem_to_hbm [thread:$0]  %s437, 128, %s439, %s419
        $region40: #{tpu_custom_call.1} parent=35 // pred_fallthru
          _
        // Predicated region
        $region41: #{tpu_custom_call.1} parent=35 // pred_check
          %p442 = pneg %p156
        $region42: #{tpu_custom_call.1} parent=35 // pred_check_branch
          %444 = sbr.rel (%p442) target = $region44
        $region43: #{tpu_custom_call.1} parent=35 // pred_region
          %446 = vsyncadd %s424, 0
          %s447 = smul.addr %s23, 8
          %s448 = scalar_lea.hbm %s5, %s447
          %s450 = sshll.u32 %s427, 4
          %s451 = int_to_ptr.vmem [resolvable:$true] %s450
          %s452 = sshll.u32 %s448, 4
          %s453 = int_to_ptr.hbm [resolvable:$true] %s452
          %455 = dma.vmem_to_hbm [thread:$0]  %s451, 128, %s453, %s424
        $region44: #{tpu_custom_call.1} parent=35 // pred_fallthru
          _
      $region36: #{tpu_custom_call.1} parent=5 // pred_fallthru
        _
      %p456 = scmp.le.s32.totalorder 2, %s18
      // Predicated region
      $region45: #{tpu_custom_call.1} parent=5 // pred_check
        %p457 = pneg %p456
      $region46: #{tpu_custom_call.1} parent=5 // pred_check_branch
        %459 = sbr.rel (%p457) target = $region48
      $region47: #{tpu_custom_call.1} parent=5 // pred_region
        %s460 = ssub.s32 %s18, 2
        // Predicated region
        $region49: #{tpu_custom_call.1} parent=47 // pred_check
          %p461 = pneg %p136
        $region50: #{tpu_custom_call.1} parent=47 // pred_check_branch
          %463 = sbr.rel (%p461) target = $region52
        $region51: #{tpu_custom_call.1} parent=47 // pred_region
          %s464 = sand.u32 %s121, 1
          %s465 = scalar_lea.sflag [#allocation3], %s464
          %s466 = sand.u32 %s121, 1
          %s467 = smul.addr %s466, 8
          %s468 = scalar_lea.vmem [#allocation2], %s467
          %470 = dma.done %s465, 128
        $region52: #{tpu_custom_call.1} parent=47 // pred_fallthru
          _
        // Predicated region
        $region53: #{tpu_custom_call.1} parent=47 // pred_check
          %p471 = pneg %p162
        $region54: #{tpu_custom_call.1} parent=47 // pred_check_branch
          %473 = sbr.rel (%p471) target = $region56
        $region55: #{tpu_custom_call.1} parent=47 // pred_region
          %s474 = sand.u32 %s147, 1
          %s475 = scalar_lea.sflag [#allocation5], %s474
          %s476 = sand.u32 %s147, 1
          %s477 = smul.addr %s476, 8
          %s478 = scalar_lea.vmem [#allocation4], %s477
          %480 = dma.done %s475, 128
        $region56: #{tpu_custom_call.1} parent=47 // pred_fallthru
          _
      $region48: #{tpu_custom_call.1} parent=5 // pred_fallthru
        _
    $region6: #{tpu_custom_call.1} parent=1 // loop_footer
      %s22 = sadd.s32 1, %s18
    $region7: #{tpu_custom_call.1} parent=1 // loop_footer_branch
      %17 = sbr.rel target = $region3
    $region8: #{tpu_custom_call.1} parent=1 // loop_exit
      _
    %481 = vsyncpa [#allocation3], 1
    %s482 = scalar_lea.sflag [#allocation3], 1
    %483 = vsyncpa %s482, 1
    %484 = vsyncpa [#allocation5], 1
    %s485 = scalar_lea.sflag [#allocation5], 1
    %486 = vsyncpa %s485, 1

</llo_original>
